<compile_context>
chip_gen: v7x
topology: tpu7x:2x2x1
jax: 0.10.0
libtpu: 0.0.40
codegen_flags: <defaults>
</compile_context>

<pallas_src>
import math

import jax
import jax.numpy as jnp
import numpy as np
from jax.experimental import pallas as pl
from jax.experimental.pallas import tpu as pltpu


# --------------------------------------------------------------------------- #
# Kernels
# --------------------------------------------------------------------------- #
def gcn_layer_kernel(a_ref, h_ref, w_ref, pb_ref, out_ref, acc_ref):
    """One GCNConv layer: out = PReLU(A_hat @ (H @ W) + b).

    grid = (row_blocks [parallel], reduction_blocks [arbitrary])
      a_ref : (TM, TK)    bf16  A_hat tile
      h_ref : (TK, F_in)  f32   activation tile (reduction slice)
      w_ref : (F_in, F_out) f32 full weight
      pb_ref: (2, F_out)  f32   row0 = bias, row1 = broadcast PReLU alpha
      acc_ref: (TM, F_out) f32  VMEM accumulator (resident across reduction axis)
    """
    k = pl.program_id(1)

    @pl.when(k == 0)
    def _init():
        acc_ref[...] = jnp.zeros_like(acc_ref)

    # Feature transform for this reduction block (tiny GEMM, f32).
    hw = jnp.dot(h_ref[...], w_ref[...], preferred_element_type=jnp.float32)
    # Adjacency aggregation: bf16 MXU operands, f32 accumulation.
    acc_ref[...] += jnp.dot(a_ref[...], hw.astype(jnp.bfloat16),
                            preferred_element_type=jnp.float32)

    @pl.when(k == pl.num_programs(1) - 1)
    def _finalize():
        bias = pb_ref[0:1, :]
        alpha = pb_ref[1:2, :]
        h = acc_ref[...] + bias                      # f32 elementwise (v5e-safe)
        out_ref[...] = jnp.where(h >= 0.0, h, alpha * h)


def tail_kernel(p_ref, h_ref, wt_ref, bt_ref, out_ref, acc_ref):
    """Folded tail: out = ((pool @ A_hat) @ H3) @ W_tail + b_tail.

    grid = (reduction_blocks [arbitrary],)
      p_ref : (G_pad, TK) bf16   pool @ A_hat tile
      h_ref : (TK, F3)    f32    H3 reduction slice
      wt_ref: (F3, 128)   f32    W4 @ Wl1 @ Wl2, lane-padded
      bt_ref: (1, 128)    f32    folded bias, lane-padded
      acc_ref: (G_pad, F3) f32   pooled-H3 accumulator
    """
    k = pl.program_id(0)

    @pl.when(k == 0)
    def _init():
        acc_ref[...] = jnp.zeros_like(acc_ref)

    acc_ref[...] += jnp.dot(p_ref[...], h_ref[...].astype(jnp.bfloat16),
                            preferred_element_type=jnp.float32)

    @pl.when(k == pl.num_programs(0) - 1)
    def _finalize():
        out_ref[...] = (jnp.dot(acc_ref[...], wt_ref[...],
                                preferred_element_type=jnp.float32)
                        + bt_ref[...])


# --------------------------------------------------------------------------- #
# pallas_call wrappers
# --------------------------------------------------------------------------- #
def _gcn_layer_call(a_bf16, h, w, pb, tm, tk, *, vmem_limit_bytes):
    n = a_bf16.shape[0]
    f_in = h.shape[1]
    f_out = w.shape[1]
    grid = (n // tm, n // tk)
    return pl.pallas_call(
        gcn_layer_kernel,
        out_shape=jax.ShapeDtypeStruct((n, f_out), jnp.float32),
        grid_spec=pltpu.PrefetchScalarGridSpec(
            num_scalar_prefetch=0,
            grid=grid,
            in_specs=[
                pl.BlockSpec((tm, tk), lambda i, k: (i, k)),       # A_hat tile
                pl.BlockSpec((tk, f_in), lambda i, k: (k, 0)),     # activations
                pl.BlockSpec((f_in, f_out), lambda i, k: (0, 0)),  # weight (full)
                pl.BlockSpec((2, f_out), lambda i, k: (0, 0)),     # [bias; alpha]
            ],
            out_specs=pl.BlockSpec((tm, f_out), lambda i, k: (i, 0)),
            scratch_shapes=[pltpu.VMEM((tm, f_out), jnp.float32)],
        ),
        compiler_params=pltpu.CompilerParams(
            dimension_semantics=("parallel", "arbitrary"),
            vmem_limit_bytes=vmem_limit_bytes,
        ),
    )(a_bf16, h, w, pb)


def _tail_call(p_bf16, h3, w_tail, b_tail, tk, *, vmem_limit_bytes):
    g_pad, n = p_bf16.shape
    f3 = h3.shape[1]
    c_pad = w_tail.shape[1]
    grid = (n // tk,)
    return pl.pallas_call(
        tail_kernel,
        out_shape=jax.ShapeDtypeStruct((g_pad, c_pad), jnp.float32),
        grid_spec=pltpu.PrefetchScalarGridSpec(
            num_scalar_prefetch=0,
            grid=grid,
            in_specs=[
                pl.BlockSpec((g_pad, tk), lambda k: (0, k)),
                pl.BlockSpec((tk, f3), lambda k: (k, 0)),
                pl.BlockSpec((f3, c_pad), lambda k: (0, 0)),
                pl.BlockSpec((1, c_pad), lambda k: (0, 0)),
            ],
            out_specs=pl.BlockSpec((g_pad, c_pad), lambda k: (0, 0)),
            scratch_shapes=[pltpu.VMEM((g_pad, f3), jnp.float32)],
        ),
        compiler_params=pltpu.CompilerParams(
            dimension_semantics=("arbitrary",),
            vmem_limit_bytes=vmem_limit_bytes,
        ),
    )(p_bf16, h3, w_tail, b_tail)


# --------------------------------------------------------------------------- #
# Forward pass (BaseGCN, eval mode)
# --------------------------------------------------------------------------- #
def base_gcn_forward(a_hat, x, pool, params, *, tm=256, tk=256,
                     vmem_limit_bytes=48 * 1024 * 1024):
    n = x.shape[0]
    num_graphs = pool.shape[0]
    num_classes = params["wl2"].shape[1]

    # ---- host/XLA-side parameter folding + zero padding (done once) --------
    blk = math.lcm(tm, tk)
    n_pad = ((n + blk - 1) // blk) * blk
    g_pad = 8                     # sublane-aligned pooled-row block
    c_pad = 128                   # lane-dense output width

    a_p = jnp.zeros((n_pad, n_pad), jnp.float32).at[:n, :n].set(a_hat)
    x_p = jnp.zeros((n_pad, x.shape[1]), jnp.float32).at[:n, :].set(x)

    # Fold global_mean_pool into (and thereby delete) the 4th adjacency pass.
    p_prime = jnp.zeros((g_pad, n_pad), jnp.float32).at[:num_graphs, :n].set(
        pool @ a_hat)

    # Collapse conv4.W, lin_1, dropout(eval) and lin_2 into one [F3, C] matrix;
    # pool rows sum to one so the conv4 bias folds into the tail bias.
    w_tail = params["w4"] @ params["wl1"] @ params["wl2"]            # [F3, C]
    b_tail = (params["b4"] @ params["wl1"] @ params["wl2"]
              + params["bl1"] @ params["wl2"] + params["bl2"])       # [1, C]
    w_tail_p = jnp.zeros((w_tail.shape[0], c_pad),
                         jnp.float32).at[:, :num_classes].set(w_tail)
    b_tail_p = jnp.zeros((1, c_pad), jnp.float32).at[:, :num_classes].set(b_tail)

    def pack_pb(b, alpha):        # row0 = bias, row1 = broadcast shared alpha
        return jnp.concatenate([b, jnp.zeros_like(b) + alpha], axis=0)

    a_bf = a_p.astype(jnp.bfloat16)
    p_bf = p_prime.astype(jnp.bfloat16)

    # ---- three GCNConv + PReLU layers (tiled, pipelined, bf16 adjacency) ---
    h = x_p
    for wk, bk, ak in (("w1", "b1", "al1"),
                       ("w2", "b2", "al2"),
                       ("w3", "b3", "al3")):
        h = _gcn_layer_call(a_bf, h, params[wk],
                            pack_pb(params[bk], params[ak]),
                            tm, tk, vmem_limit_bytes=vmem_limit_bytes)

    # ---- folded conv4 + pool + linear tail, lane-dense padded output -------
    out_p = _tail_call(p_bf, h, w_tail_p, b_tail_p, tk,
                       vmem_limit_bytes=vmem_limit_bytes)
    return out_p[:num_graphs, :num_classes]


# --------------------------------------------------------------------------- #
# Pure-JAX f32 reference (for a sanity check), parameter init, graph builder
# --------------------------------------------------------------------------- #
def base_gcn_reference(a_hat, x, pool, params):
    def prelu(h, a):
        return jnp.where(h >= 0, h, a * h)
    h = prelu(a_hat @ (x @ params["w1"]) + params["b1"], params["al1"])
    h = prelu(a_hat @ (h @ params["w2"]) + params["b2"], params["al2"])
    h = prelu(a_hat @ (h @ params["w3"]) + params["b3"], params["al3"])
    h = a_hat @ (h @ params["w4"]) + params["b4"]
    pooled = pool @ h
    h = pooled @ params["wl1"] + params["bl1"]        # dropout == identity (eval)
    return h @ params["wl2"] + params["bl2"]


def make_params(key, in_feat=8, h_feat=8, num_classes=4):
    dims = [
        ("w1", (in_feat, h_feat)),
        ("w2", (h_feat, h_feat * 4)),
        ("w3", (h_feat * 4, h_feat * 8)),
        ("w4", (h_feat * 8, h_feat * 16)),
        ("wl1", (h_feat * 16, h_feat * 8)),   # Linear weight, pre-transposed [in, out]
        ("wl2", (h_feat * 8, num_classes)),   # Linear weight, pre-transposed [in, out]
    ]
    params = {}
    keys = jax.random.split(key, len(dims) + 6)
    for (name, shape), k in zip(dims, keys[:len(dims)]):
        fan_in, fan_out = shape
        scale = jnp.sqrt(2.0 / (fan_in + fan_out))
        params[name] = scale * jax.random.normal(k, shape, dtype=jnp.float32)
    # small non-zero biases so the bias/alpha path is exercised
    bias_shapes = [("b1", h_feat), ("b2", h_feat * 4), ("b3", h_feat * 8),
                   ("b4", h_feat * 16), ("bl1", h_feat * 8), ("bl2", num_classes)]
    for (name, f), k in zip(bias_shapes, keys[len(dims):]):
        params[name] = 0.1 * jax.random.normal(k, (1, f), dtype=jnp.float32)
    # PReLU single shared parameter, PyTorch default init = 0.25
    for name in ("al1", "al2", "al3"):
        params[name] = jnp.full((1, 1), 0.25, jnp.float32)
    return params


def build_graph(num_nodes, batch_np, edge_index_np):
    """Dense symmetric GCN normalization + mean-pool matrix (host-side glue)."""
    A = np.zeros((num_nodes, num_nodes), np.float32)
    src, dst = edge_index_np
    A[src, dst] = 1.0
    A[dst, src] = 1.0                       # undirected
    A_tilde = A + np.eye(num_nodes, dtype=np.float32)
    deg = A_tilde.sum(axis=1)
    d_inv_sqrt = 1.0 / np.sqrt(deg)
    a_hat = (d_inv_sqrt[:, None] * A_tilde) * d_inv_sqrt[None, :]

    num_graphs = int(batch_np.max()) + 1
    pool = np.zeros((num_graphs, num_nodes), np.float32)
    for g in range(num_graphs):
        mask = batch_np == g
        pool[g, mask] = 1.0 / mask.sum()
    return jnp.asarray(a_hat), jnp.asarray(pool)


# TODO(synk): real workloads with sparse graphs should use a block-sparse A_hat
# (PrefetchScalarGridSpec with a nonzero-tile list driving the A_hat index_map);
# the dense path here scales as O(N^2) bytes.

if __name__ == "__main__":
    in_feat, h_feat, num_classes = 8, 8, 4
    nodes_per_graph, num_graphs_ex = 256, 2
    num_nodes = nodes_per_graph * num_graphs_ex       # 512 -> grid (2, 2) at 256 tiles
    batch_np = np.repeat(np.arange(num_graphs_ex), nodes_per_graph).astype(np.int32)

    # ring edges inside each graph (deterministic synthetic topology)
    src, dst = [], []
    for g in range(num_graphs_ex):
        base = g * nodes_per_graph
        for i in range(nodes_per_graph):
            src.append(base + i)
            dst.append(base + (i + 1) % nodes_per_graph)
    edge_index_np = np.array([src, dst], np.int64)

    key = jax.random.PRNGKey(0)
    k_x, k_p = jax.random.split(key)
    x = jax.random.normal(k_x, (num_nodes, in_feat), dtype=jnp.float32)
    params = make_params(k_p, in_feat, h_feat, num_classes)
    a_hat, pool = build_graph(num_nodes, batch_np, edge_index_np)

    out = base_gcn_forward(a_hat, x, pool, params)
    jax.block_until_ready(out)
    assert out.shape == (num_graphs_ex, num_classes)

    # sanity check against a pure-f32 JAX reference (bf16 adjacency/activation
    # operands + f32 accumulation -> only small drift expected)
    ref = base_gcn_reference(a_hat, x, pool, params)
    err = float(jnp.max(jnp.abs(out - ref)))
    assert err < 5e-2, f"mismatch vs f32 reference: {err}"

    print("KERNEL_OK")
</pallas_src>

<mosaic_0001>
module attributes {stable_mosaic.version = 11 : i64} {
  func.func @gcn_layer_kernel(%arg0: i32, %arg1: i32, %arg2: memref<256x256xbf16, #tpu.memory_space<vmem>>, %arg3: memref<256x8xf32, #tpu.memory_space<vmem>>, %arg4: memref<8x8xf32, #tpu.memory_space<vmem>>, %arg5: memref<2x8xf32, #tpu.memory_space<vmem>>, %arg6: memref<256x8xf32, #tpu.memory_space<vmem>>, %arg7: memref<256x8xf32, #tpu.memory_space<vmem>>) attributes {dimension_semantics = [#tpu.dimension_semantics<parallel>, #tpu.dimension_semantics<arbitrary>], iteration_bounds = array<i64: 2, 2>, scalar_prefetch = 0 : i64, scratch_operands = 1 : i64, tpu.core_type = #tpu.core_type<tc>, window_params = [{transform_indices = @transform_0, window_bounds = array<i64: 256, 256>}, {transform_indices = @transform_1, window_bounds = array<i64: 256, 8>}, {pipeline_mode = #tpu.pipeline_mode<synchronous>, transform_indices = @transform_2, window_bounds = array<i64: 8, 8>}, {pipeline_mode = #tpu.pipeline_mode<synchronous>, transform_indices = @transform_3, window_bounds = array<i64: 2, 8>}, {transform_indices = @transform_4, window_bounds = array<i64: 256, 8>}]} {
    %c0_i32 = arith.constant 0 : i32
    %0 = arith.cmpi eq, %arg1, %c0_i32 : i32
    %1 = arith.extui %0 : i1 to i32
    %c0_i32_0 = arith.constant 0 : i32
    %2 = arith.cmpi ne, %1, %c0_i32_0 : i32
    scf.if %2 {
      %cst_12 = arith.constant 0.000000e+00 : f32
      %15 = vector.broadcast %cst_12 : f32 to vector<256x8xf32>
      %c0_13 = arith.constant 0 : index
      %c0_14 = arith.constant 0 : index
      %16 = vector.load %arg7[%c0_13, %c0_14] : memref<256x8xf32, #tpu.memory_space<vmem>>, vector<256x8xf32>
      tpu.vector_store %arg7[%c0_13, %c0_14], %15 {strides = array<i32>} : memref<256x8xf32, #tpu.memory_space<vmem>>, vector<256x8xf32>,
    } else {
    }
    %c0 = arith.constant 0 : index
    %c0_1 = arith.constant 0 : index
    %3 = vector.load %arg3[%c0, %c0_1] : memref<256x8xf32, #tpu.memory_space<vmem>>, vector<256x8xf32>
    %c0_2 = arith.constant 0 : index
    %c0_3 = arith.constant 0 : index
    %4 = vector.load %arg4[%c0_2, %c0_3] : memref<8x8xf32, #tpu.memory_space<vmem>>, vector<8x8xf32>
    %cst = arith.constant dense<0.000000e+00> : vector<256x8xf32>
    %5 = tpu.matmul %3, %4, %cst {dimension_numbers = #tpu.dot_dimension_numbers<[1], [0], [0], [1], [0, 0, 1, 1], [], []>} : vector<256x8xf32>, vector<8x8xf32>, vector<256x8xf32> -> vector<256x8xf32>
    %c0_4 = arith.constant 0 : index
    %c0_5 = arith.constant 0 : index
    %6 = vector.load %arg7[%c0_4, %c0_5] : memref<256x8xf32, #tpu.memory_space<vmem>>, vector<256x8xf32>
    %c0_6 = arith.constant 0 : index
    %c0_7 = arith.constant 0 : index
    %7 = vector.load %arg2[%c0_6, %c0_7] : memref<256x256xbf16, #tpu.memory_space<vmem>>, vector<256x256xbf16>
    %8 = arith.truncf %5 : vector<256x8xf32> to vector<256x8xbf16>
    %cst_8 = arith.constant dense<0.000000e+00> : vector<256x8xf32>
    %9 = tpu.matmul %7, %8, %cst_8 {dimension_numbers = #tpu.dot_dimension_numbers<[1], [0], [0], [1], [0, 0, 1, 1], [], []>} : vector<256x256xbf16>, vector<256x8xbf16>, vector<256x8xf32> -> vector<256x8xf32>
    %10 = arith.addf %6, %9 : vector<256x8xf32>
    %c0_9 = arith.constant 0 : index
    %c0_10 = arith.constant 0 : index
    %11 = vector.load %arg7[%c0_9, %c0_10] : memref<256x8xf32, #tpu.memory_space<vmem>>, vector<256x8xf32>
    tpu.vector_store %arg7[%c0_9, %c0_10], %10 {strides = array<i32>} : memref<256x8xf32, #tpu.memory_space<vmem>>, vector<256x8xf32>,
    %c1_i32 = arith.constant 1 : i32
    %12 = arith.cmpi eq, %arg1, %c1_i32 : i32
    %13 = arith.extui %12 : i1 to i32
    %c0_i32_11 = arith.constant 0 : i32
    %14 = arith.cmpi ne, %13, %c0_i32_11 : i32
    scf.if %14 {
      %c0_12 = arith.constant 0 : index
      %c0_13 = arith.constant 0 : index
      %15 = vector.load %arg5[%c0_12, %c0_13] : memref<2x8xf32, #tpu.memory_space<vmem>>, vector<1x8xf32>
      %c1 = arith.constant 1 : index
      %c0_14 = arith.constant 0 : index
      %16 = vector.load %arg5[%c1, %c0_14] : memref<2x8xf32, #tpu.memory_space<vmem>>, vector<1x8xf32>
      %c0_15 = arith.constant 0 : index
      %c0_16 = arith.constant 0 : index
      %17 = vector.load %arg7[%c0_15, %c0_16] : memref<256x8xf32, #tpu.memory_space<vmem>>, vector<256x8xf32>
      %18 = vector.broadcast %15 : vector<1x8xf32> to vector<256x8xf32>
      %19 = arith.addf %17, %18 : vector<256x8xf32>
      %cst_17 = arith.constant 0.000000e+00 : f32
      %20 = vector.broadcast %cst_17 : f32 to vector<256x8xf32>
      %21 = arith.cmpf oge, %19, %20 : vector<256x8xf32>
      %22 = vector.broadcast %16 : vector<1x8xf32> to vector<256x8xf32>
      %23 = arith.mulf %22, %19 : vector<256x8xf32>
      %24 = arith.select %21, %19, %23 : vector<256x8xi1>, vector<256x8xf32>
      %c0_18 = arith.constant 0 : index
      %c0_19 = arith.constant 0 : index
      %25 = vector.load %arg6[%c0_18, %c0_19] : memref<256x8xf32, #tpu.memory_space<vmem>>, vector<256x8xf32>
      tpu.vector_store %arg6[%c0_18, %c0_19], %24 {strides = array<i32>} : memref<256x8xf32, #tpu.memory_space<vmem>>, vector<256x8xf32>,
    } else {
    }
    return
  }
  func.func @transform_0(%arg0: i32, %arg1: i32) -> (i32, i32) {
    %c0_i32 = arith.constant 0 : i32
    return %arg0, %arg1 : i32, i32
  }
  func.func @transform_1(%arg0: i32, %arg1: i32) -> (i32, i32) {
    %c0_i32 = arith.constant 0 : i32
    %c0_i32_0 = arith.constant 0 : i32
    return %arg1, %c0_i32 : i32, i32
  }
  func.func @transform_2(%arg0: i32, %arg1: i32) -> (i32, i32) {
    %c0_i32 = arith.constant 0 : i32
    %c0_i32_0 = arith.constant 0 : i32
    %c0_i32_1 = arith.constant 0 : i32
    return %c0_i32, %c0_i32_0 : i32, i32
  }
  func.func @transform_3(%arg0: i32, %arg1: i32) -> (i32, i32) {
    %c0_i32 = arith.constant 0 : i32
    %c0_i32_0 = arith.constant 0 : i32
    %c0_i32_1 = arith.constant 0 : i32
    return %c0_i32, %c0_i32_0 : i32, i32
  }
  func.func @transform_4(%arg0: i32, %arg1: i32) -> (i32, i32) {
    %c0_i32 = arith.constant 0 : i32
    %c0_i32_0 = arith.constant 0 : i32
    return %arg0, %c0_i32 : i32, i32
  }
}

</mosaic_0001>

<llo_original>
// kernel: tpu_custom_call.1
$region0: #{tpu_custom_call.1}
  #allocation0 [shape = 'u32[]', space=smem, size = 0x4, offset = 0x4, fixed_abs, tag = 'smem constant byte address 0x4 - core index']
  #allocation1 [shape = 'u32[144,128]{1,0:T(1,128)}', space=vmem, size = 0x12000, scoped, tag = 'internal scratch']
  #allocation2 [shape = 'f32[256,8]{1,0:T(8,128)}', space=vmem, size = 0x20000, scoped, tag = 'scratch operand']
  %s0 = inlined_call_operand.hbm [shape: bf16[512,512], index: 0, kind: input, shape index: {}]
  %s1 = inlined_call_operand.vmem [shape: f32[512,8], index: 1, kind: input, shape index: {}]
  %s2 = inlined_call_operand.vmem [shape: f32[8,8], index: 2, kind: input, shape index: {}]
  %s3 = inlined_call_operand.vmem [shape: f32[2,8], index: 3, kind: input, shape index: {}]
  %s4 = inlined_call_operand.vmem [shape: f32[512,8], index: 4, kind: output, shape index: {}]
  %s5 = sld [smem:[#allocation0]]
  $region61: #{tpu_custom_call.1} parent=0
    _
  %s7 = ssub.s32 1, %s5
  %s8 = scalar_select 0, %s7, %s5
  $region1: #{tpu_custom_call.1} parent=0
    #allocation3 [shape = 'u8[262144]{0}', space=vmem, size = 0x40000, scoped, tag = 'input window, operand 0']
    #allocation4 [shape = 's32[2]{0}', space=sflag, size = 0x8, scoped, tag = 'scoped memory for tpu_custom_call.1']
    %9 = vsyncpa [#allocation4], 0
    %s10 = scalar_lea.sflag [#allocation4], 1
    %11 = vsyncpa %s10, 0
    loop: start=0, step=1, limit=6
    $region2: #{tpu_custom_call.1} parent=1 // loop_pre_header
      _
    $region3: #{tpu_custom_call.1} parent=1 // loop_header
      %s13 = sphi 0, %s17
      %p14 = scmp.ge.s32.totalorder %s13, 6
      %s20 = sphi 0, %s32
      %s21 = sphi 0, %s28
      %s22 = sphi 0, %s20
      %s23 = sphi 0, %s21
      %s24 = sphi 0, %s22
      %s25 = sphi 0, %s23
      %s37 = sphi 0, %s39
      %s40 = sphi 0, %s37
      %s41 = sphi 0, %s40
      %s57 = sphi 0, %s41
      %s63 = sphi 0, %s65
      %s66 = sphi 0, %s63
      %s67 = sphi 0, %s66
      %s83 = sphi 0, %s67
      %s87 = sphi 0, %s87
      %s89 = sphi 0, %s87
      %s90 = sphi 0, %s89
      %s104 = sphi 0, %s90
      %s108 = sphi 0, %s108
      %s110 = sphi 0, %s108
      %s111 = sphi 0, %s110
      %s125 = sphi 0, %s111
      %s131 = sphi 0, %s133
      %s134 = sphi 0, %s131
      %s135 = sphi 0, %s134
      %s151 = sphi 0, %s135
    $region4: #{tpu_custom_call.1} parent=1 // loop_header_branch
      %16 = sbr.rel (%p14) target = $region8
    $region5: #{tpu_custom_call.1} parent=1 // loop_body
      %s18 = ssub.s32 %s13, 1
      %s19 = ssub.s32 %s13, 2
      %s26 = sadd.s32 1, %s21
      %p27 = scmp.ge.s32.totalorder %s26, 2
      %s28 = scalar_select %p27, 0, %s26
      %s29 = sadd.s32 1, %s20
      %s30 = scalar_select %p27, %s29, %s20
      %p31 = scmp.ge.s32.totalorder %s30, 2
      %s32 = scalar_select %p31, 0, %s30
      %s33 = ssub.s32 %s20, %s32
      %s34 = ssub.s32 %s21, %s28
      %s35 = sor.u32 %s33, %s34
      %p36 = scmp.eq.s32.totalorder %s35, 0
      %s38 = sadd.s32 %s37, 1
      %s39 = scalar_select %p36, %s37, %s38
      %p42 = pneg %p36
      %p43 = scmp.eq.s32.totalorder %s13, 3
      %p44 = por %p42, %p43
      %p45 = scmp.ne.s32.totalorder %s37, %s40
      %p46 = scmp.eq.s32.totalorder %s13, 0
      %p47 = por %p45, %p46
      %p48 = scmp.ne.s32.totalorder %s37, %s40
      %p49 = scmp.eq.s32.totalorder %s18, 3
      %p50 = por %p48, %p49
      %p51 = scmp.ne.s32.totalorder %s40, %s41
      %p52 = scmp.eq.s32.totalorder %s18, 0
      %p53 = por %p51, %p52
      %p54 = scmp.ne.s32.totalorder %s40, %s41
      %p55 = scmp.eq.s32.totalorder %s19, 3
      %p56 = por %p54, %p55
      %p58 = scmp.ne.s32.totalorder %s41, %s57
      %p59 = scmp.eq.s32.totalorder %s19, 0
      %p60 = por %p58, %p59
      %s61 = ssub.s32 %s21, %s28
      %p62 = scmp.eq.s32.totalorder %s61, 0
      %s64 = sadd.s32 %s63, 1
      %s65 = scalar_select %p62, %s63, %s64
      %p68 = pneg %p62
      %p69 = scmp.eq.s32.totalorder %s13, 3
      %p70 = por %p68, %p69
      %p71 = scmp.ne.s32.totalorder %s63, %s66
      %p72 = scmp.eq.s32.totalorder %s13, 0
      %p73 = por %p71, %p72
      %p74 = scmp.ne.s32.totalorder %s63, %s66
      %p75 = scmp.eq.s32.totalorder %s18, 3
      %p76 = por %p74, %p75
      %p77 = scmp.ne.s32.totalorder %s66, %s67
      %p78 = scmp.eq.s32.totalorder %s18, 0
      %p79 = por %p77, %p78
      %p80 = scmp.ne.s32.totalorder %s66, %s67
      %p81 = scmp.eq.s32.totalorder %s19, 3
      %p82 = por %p80, %p81
      %p84 = scmp.ne.s32.totalorder %s67, %s83
      %p85 = scmp.eq.s32.totalorder %s19, 0
      %p86 = por %p84, %p85
      %s88 = sadd.s32 %s87, 1
      %p91 = scmp.eq.s32.totalorder %s13, 3
      %p92 = scmp.ne.s32.totalorder %s87, %s89
      %p93 = scmp.eq.s32.totalorder %s13, 0
      %p94 = por %p92, %p93
      %p95 = scmp.ne.s32.totalorder %s87, %s89
      %p96 = scmp.eq.s32.totalorder %s18, 3
      %p97 = por %p95, %p96
      %p98 = scmp.ne.s32.totalorder %s89, %s90
      %p99 = scmp.eq.s32.totalorder %s18, 0
      %p100 = por %p98, %p99
      %p101 = scmp.ne.s32.totalorder %s89, %s90
      %p102 = scmp.eq.s32.totalorder %s19, 3
      %p103 = por %p101, %p102
      %p105 = scmp.ne.s32.totalorder %s90, %s104
      %p106 = scmp.eq.s32.totalorder %s19, 0
      %p107 = por %p105, %p106
      %s109 = sadd.s32 %s108, 1
      %p112 = scmp.eq.s32.totalorder %s13, 3
      %p113 = scmp.ne.s32.totalorder %s108, %s110
      %p114 = scmp.eq.s32.totalorder %s13, 0
      %p115 = por %p113, %p114
      %p116 = scmp.ne.s32.totalorder %s108, %s110
      %p117 = scmp.eq.s32.totalorder %s18, 3
      %p118 = por %p116, %p117
      %p119 = scmp.ne.s32.totalorder %s110, %s111
      %p120 = scmp.eq.s32.totalorder %s18, 0
      %p121 = por %p119, %p120
      %p122 = scmp.ne.s32.totalorder %s110, %s111
      %p123 = scmp.eq.s32.totalorder %s19, 3
      %p124 = por %p122, %p123
      %p126 = scmp.ne.s32.totalorder %s111, %s125
      %p127 = scmp.eq.s32.totalorder %s19, 0
      %p128 = por %p126, %p127
      %s129 = ssub.s32 %s20, %s32
      %p130 = scmp.eq.s32.totalorder %s129, 0
      %s132 = sadd.s32 %s131, 1
      %s133 = scalar_select %p130, %s131, %s132
      %p136 = pneg %p130
      %p137 = scmp.eq.s32.totalorder %s13, 3
      %p138 = por %p136, %p137
      %p139 = scmp.ne.s32.totalorder %s131, %s134
      %p140 = scmp.eq.s32.totalorder %s13, 0
      %p141 = por %p139, %p140
      %p142 = scmp.ne.s32.totalorder %s131, %s134
      %p143 = scmp.eq.s32.totalorder %s18, 3
      %p144 = por %p142, %p143
      %p145 = scmp.ne.s32.totalorder %s134, %s135
      %p146 = scmp.eq.s32.totalorder %s18, 0
      %p147 = por %p145, %p146
      %p148 = scmp.ne.s32.totalorder %s134, %s135
      %p149 = scmp.eq.s32.totalorder %s19, 3
      %p150 = por %p148, %p149
      %p152 = scmp.ne.s32.totalorder %s135, %s151
      %p153 = scmp.eq.s32.totalorder %s19, 0
      %p154 = por %p152, %p153
      %p155 = scmp.le.s32.totalorder 1, %s13
      %p156 = scmp.lt.s32.totalorder %s13, 5
      %p157 = pnand %p155, %p156
      %p158 = pneg %p157
      // Predicated region
      $region9: #{tpu_custom_call.1} parent=5 // pred_check
        _
      $region10: #{tpu_custom_call.1} parent=5 // pred_check_branch
        %160 = sbr.rel (%p157) target = $region12
      $region11: #{tpu_custom_call.1} parent=5 // pred_region
        %s161 = ssub.s32 %s13, 1
        // Predicated region
        $region13: #{tpu_custom_call.1} parent=11 // pred_check
          %p162 = pneg %p100
        $region14: #{tpu_custom_call.1} parent=11 // pred_check_branch
          %164 = sbr.rel (%p162) target = $region16
        $region15: #{tpu_custom_call.1} parent=11 // pred_region
          _
        $region16: #{tpu_custom_call.1} parent=11 // pred_fallthru
          _
        // Predicated region
        $region17: #{tpu_custom_call.1} parent=11 // pred_check
          %p165 = pneg %p121
        $region18: #{tpu_custom_call.1} parent=11 // pred_check_branch
          %167 = sbr.rel (%p165) target = $region20
        $region19: #{tpu_custom_call.1} parent=11 // pred_region
          _
        $region20: #{tpu_custom_call.1} parent=11 // pred_fallthru
          _
      $region12: #{tpu_custom_call.1} parent=5 // pred_fallthru
        _
      %p168 = scmp.lt.s32.totalorder %s13, 4
      // Predicated region
      $region21: #{tpu_custom_call.1} parent=5 // pred_check
        %p169 = pneg %p168
      $region22: #{tpu_custom_call.1} parent=5 // pred_check_branch
        %171 = sbr.rel (%p169) target = $region24
      $region23: #{tpu_custom_call.1} parent=5 // pred_region
        // Predicated region
        $region25: #{tpu_custom_call.1} parent=23 // pred_check
          %p172 = pneg %p47
        $region26: #{tpu_custom_call.1} parent=23 // pred_check_branch
          %174 = sbr.rel (%p172) target = $region28
        $region27: #{tpu_custom_call.1} parent=23 // pred_region
          %s175 = sand.u32 %s37, 1
          %s176 = scalar_lea.sflag [#allocation4], %s175
          %s177 = sand.u32 %s37, 1
          %s178 = smul.addr %s177, 256
          %s179 = scalar_lea.vmem [#allocation3], %s178
          %s180 = smul.u32 32, %s20
          %s181 = smul.u32 2, %s21
          %s183 = ssub.s32 4096, 4096
          %184 = vsyncadd %s176, %s183
          %s185 = smul.addr %s180, 4
          %s186 = sadd.s32 %s181, %s185
          %s187 = smul.addr %s186, 64
          %s188 = scalar_lea.hbm %s0, %s187
          %s189 = sshll.u32 %s179, 4
          %s190 = int_to_ptr.vmem [resolvable:$true] %s189
          %195 = dma.hbm_to_vmem [thread:$0]  %s188, 4096, %s190, %s176, 256, 128, 8
        $region28: #{tpu_custom_call.1} parent=23 // pred_fallthru
          _
        // Predicated region
        $region29: #{tpu_custom_call.1} parent=23 // pred_check
          %p196 = pneg %p73
        $region30: #{tpu_custom_call.1} parent=23 // pred_check_branch
          %198 = sbr.rel (%p196) target = $region32
        $region31: #{tpu_custom_call.1} parent=23 // pred_region
          %s199 = smul.u32 32, %s21
          %p200 = scmp.lt.s32.totalorder %s199, 63
          %s201 = scalar_select %p200, %s199, 63
          %s202 = smul.addr %s201, 8
          %s203 = scalar_lea.vmem %s1, %s202
          %s204 = smul.u32 32, %s21
        $region32: #{tpu_custom_call.1} parent=23 // pred_fallthru
          _
      $region24: #{tpu_custom_call.1} parent=5 // pred_fallthru
        _
      %p205 = scmp.le.s32.totalorder 1, %s13
      %p206 = scmp.lt.s32.totalorder %s13, 5
      %p207 = pnand %p205, %p206
      %p208 = pneg %p207
      // Predicated region
      $region33: #{tpu_custom_call.1} parent=5 // pred_check
        _
      $region34: #{tpu_custom_call.1} parent=5 // pred_check_branch
        %210 = sbr.rel (%p207) target = $region36
      $region35: #{tpu_custom_call.1} parent=5 // pred_region
        %s211 = ssub.s32 %s13, 1
        %s212 = sand.u32 %s40, 1
        %s213 = scalar_lea.sflag [#allocation4], %s212
        %s214 = sand.u32 %s40, 1
        %s215 = smul.addr %s214, 256
        %s216 = scalar_lea.vmem [#allocation3], %s215
        // Predicated region
        $region37: #{tpu_custom_call.1} parent=35 // pred_check
          %p217 = pneg %p53
        $region38: #{tpu_custom_call.1} parent=35 // pred_check_branch
          %219 = sbr.rel (%p217) target = $region40
        $region39: #{tpu_custom_call.1} parent=35 // pred_region
          %220 = dma.done %s213, 4096
        $region40: #{tpu_custom_call.1} parent=35 // pred_fallthru
          _
        %s221 = sand.u32 %s40, 1
        %s222 = scalar_lea.sflag [#allocation4], %s221
        %s223 = sand.u32 %s40, 1
        %s224 = smul.addr %s223, 256
        %s225 = scalar_lea.vmem [#allocation3], %s224
        %p226 = pneg %p53
        %p227 = pneg %p50
        %s228 = smul.u32 32, %s23
        %p229 = scmp.lt.s32.totalorder %s228, 63
        %s230 = scalar_select %p229, %s228, 63
        %s231 = smul.addr %s230, 8
        %s232 = scalar_lea.vmem %s1, %s231
        %p233 = pneg %p79
        %p234 = pneg %p76
        %p235 = pneg %p100
        %p236 = pneg %p97
        %p237 = pneg %p121
        %p238 = pneg %p118
        %p239 = pneg %p147
        %p240 = pneg %p144
        %s241 = smul.u32 32, %s22
        %p242 = scmp.lt.s32.totalorder %s241, 63
        %s243 = scalar_select %p242, %s241, 63
        %s244 = smul.addr %s243, 8
        %s245 = scalar_lea.vmem %s4, %s244
        %s246 = smul.u32 32, %s22
        %s247 = smul.u32 2, %s23
        %s248 = smul.u32 32, %s23
        %p249 = scmp.lt.s32.totalorder %s248, 63
        %s250 = scalar_select %p249, %s248, 63
        %s251 = smul.addr %s250, 8
        %s252 = scalar_lea.vmem %s1, %s251
        %s253 = smul.u32 32, %s23
        %s254 = smul.u32 32, %s22
        %p255 = scmp.lt.s32.totalorder %s254, 63
        %s256 = scalar_select %p255, %s254, 63
        %s257 = smul.addr %s256, 8
        %s258 = scalar_lea.vmem %s4, %s257
        %s259 = smul.u32 32, %s22
        %p261 = scmp.eq.s32.totalorder %s23, 0
        // Predicated region
        $region41: #{tpu_custom_call.1} parent=35 // pred_check
          %p262 = pneg %p261
        $region42: #{tpu_custom_call.1} parent=35 // pred_check_branch
          %264 = sbr.rel (%p262) target = $region44
        $region43: #{tpu_custom_call.1} parent=35 // pred_region
          %vm265 = vcmask 64512
          %266 = vst.msk [vmem:[#allocation2] sm:$0xff] %vm265, 0.0
          %267 = vst.msk [vmem:[#allocation2 + $0x8] sm:$0xff] %vm265, 0.0
          %268 = vst.msk [vmem:[#allocation2 + $0x10] sm:$0xff] %vm265, 0.0
          %269 = vst.msk [vmem:[#allocation2 + $0x18] sm:$0xff] %vm265, 0.0
          %270 = vst.msk [vmem:[#allocation2 + $0x20] sm:$0xff] %vm265, 0.0
          %271 = vst.msk [vmem:[#allocation2 + $0x28] sm:$0xff] %vm265, 0.0
          %272 = vst.msk [vmem:[#allocation2 + $0x30] sm:$0xff] %vm265, 0.0
          %273 = vst.msk [vmem:[#allocation2 + $0x38] sm:$0xff] %vm265, 0.0
          %274 = vst.msk [vmem:[#allocation2 + $0x40] sm:$0xff] %vm265, 0.0
          %275 = vst.msk [vmem:[#allocation2 + $0x48] sm:$0xff] %vm265, 0.0
          %276 = vst.msk [vmem:[#allocation2 + $0x50] sm:$0xff] %vm265, 0.0
          %277 = vst.msk [vmem:[#allocation2 + $0x58] sm:$0xff] %vm265, 0.0
          %278 = vst.msk [vmem:[#allocation2 + $0x60] sm:$0xff] %vm265, 0.0
          %279 = vst.msk [vmem:[#allocation2 + $0x68] sm:$0xff] %vm265, 0.0
          %280 = vst.msk [vmem:[#allocation2 + $0x70] sm:$0xff] %vm265, 0.0
          %281 = vst.msk [vmem:[#allocation2 + $0x78] sm:$0xff] %vm265, 0.0
          %282 = vst.msk [vmem:[#allocation2 + $0x80] sm:$0xff] %vm265, 0.0
          %283 = vst.msk [vmem:[#allocation2 + $0x88] sm:$0xff] %vm265, 0.0
          %284 = vst.msk [vmem:[#allocation2 + $0x90] sm:$0xff] %vm265, 0.0
          %285 = vst.msk [vmem:[#allocation2 + $0x98] sm:$0xff] %vm265, 0.0
          %286 = vst.msk [vmem:[#allocation2 + $0xa0] sm:$0xff] %vm265, 0.0
          %287 = vst.msk [vmem:[#allocation2 + $0xa8] sm:$0xff] %vm265, 0.0
          %288 = vst.msk [vmem:[#allocation2 + $0xb0] sm:$0xff] %vm265, 0.0
          %289 = vst.msk [vmem:[#allocation2 + $0xb8] sm:$0xff] %vm265, 0.0
          %290 = vst.msk [vmem:[#allocation2 + $0xc0] sm:$0xff] %vm265, 0.0
          %291 = vst.msk [vmem:[#allocation2 + $0xc8] sm:$0xff] %vm265, 0.0
          %292 = vst.msk [vmem:[#allocation2 + $0xd0] sm:$0xff] %vm265, 0.0
          %293 = vst.msk [vmem:[#allocation2 + $0xd8] sm:$0xff] %vm265, 0.0
          %294 = vst.msk [vmem:[#allocation2 + $0xe0] sm:$0xff] %vm265, 0.0
          %295 = vst.msk [vmem:[#allocation2 + $0xe8] sm:$0xff] %vm265, 0.0
          %296 = vst.msk [vmem:[#allocation2 + $0xf0] sm:$0xff] %vm265, 0.0
          %297 = vst.msk [vmem:[#allocation2 + $0xf8] sm:$0xff] %vm265, 0.0
        $region44: #{tpu_custom_call.1} parent=35 // pred_fallthru
          _
        %v298 = vld [vmem:[%s252] sm:$0xff]
        %v299 = vld [vmem:[%s252 + $0x8] sm:$0xff]
        %v300 = vld [vmem:[%s252 + $0x10] sm:$0xff]
        %v301 = vld [vmem:[%s252 + $0x18] sm:$0xff]
        %v302 = vld [vmem:[%s252 + $0x20] sm:$0xff]
        %v303 = vld [vmem:[%s252 + $0x28] sm:$0xff]
        %v304 = vld [vmem:[%s252 + $0x30] sm:$0xff]
        %v305 = vld [vmem:[%s252 + $0x38] sm:$0xff]
        %v306 = vld [vmem:[%s252 + $0x40] sm:$0xff]
        %v307 = vld [vmem:[%s252 + $0x48] sm:$0xff]
        %v308 = vld [vmem:[%s252 + $0x50] sm:$0xff]
        %v309 = vld [vmem:[%s252 + $0x58] sm:$0xff]
        %v310 = vld [vmem:[%s252 + $0x60] sm:$0xff]
        %v311 = vld [vmem:[%s252 + $0x68] sm:$0xff]
        %v312 = vld [vmem:[%s252 + $0x70] sm:$0xff]
        %v313 = vld [vmem:[%s252 + $0x78] sm:$0xff]
        %v314 = vld [vmem:[%s252 + $0x80] sm:$0xff]
        %v315 = vld [vmem:[%s252 + $0x88] sm:$0xff]
        %v316 = vld [vmem:[%s252 + $0x90] sm:$0xff]
        %v317 = vld [vmem:[%s252 + $0x98] sm:$0xff]
        %v318 = vld [vmem:[%s252 + $0xa0] sm:$0xff]
        %v319 = vld [vmem:[%s252 + $0xa8] sm:$0xff]
        %v320 = vld [vmem:[%s252 + $0xb0] sm:$0xff]
        %v321 = vld [vmem:[%s252 + $0xb8] sm:$0xff]
        %v322 = vld [vmem:[%s252 + $0xc0] sm:$0xff]
        %v323 = vld [vmem:[%s252 + $0xc8] sm:$0xff]
        %v324 = vld [vmem:[%s252 + $0xd0] sm:$0xff]
        %v325 = vld [vmem:[%s252 + $0xd8] sm:$0xff]
        %v326 = vld [vmem:[%s252 + $0xe0] sm:$0xff]
        %v327 = vld [vmem:[%s252 + $0xe8] sm:$0xff]
        %v328 = vld [vmem:[%s252 + $0xf0] sm:$0xff]
        %v329 = vld [vmem:[%s252 + $0xf8] sm:$0xff]
        %v330 = vld [vmem:[%s2] sm:$0xff]
        %vm331 = vcmask 64512
        %v333 = vsel %vm331, %v298, 0
        %v336 = vsel %vm331, %v299, 0
        %v339 = vsel %vm331, %v300, 0
        %v342 = vsel %vm331, %v301, 0
        %v345 = vsel %vm331, %v302, 0
        %v348 = vsel %vm331, %v303, 0
        %v351 = vsel %vm331, %v304, 0
        %v354 = vsel %vm331, %v305, 0
        %v357 = vsel %vm331, %v306, 0
        %v360 = vsel %vm331, %v307, 0
        %v363 = vsel %vm331, %v308, 0
        %v366 = vsel %vm331, %v309, 0
        %v369 = vsel %vm331, %v310, 0
        %v372 = vsel %vm331, %v311, 0
        %v375 = vsel %vm331, %v312, 0
        %v378 = vsel %vm331, %v313, 0
        %v381 = vsel %vm331, %v314, 0
        %v384 = vsel %vm331, %v315, 0
        %v387 = vsel %vm331, %v316, 0
        %v390 = vsel %vm331, %v317, 0
        %v393 = vsel %vm331, %v318, 0
        %v396 = vsel %vm331, %v319, 0
        %v399 = vsel %vm331, %v320, 0
        %v402 = vsel %vm331, %v321, 0
        %v405 = vsel %vm331, %v322, 0
        %v408 = vsel %vm331, %v323, 0
        %v411 = vsel %vm331, %v324, 0
        %v414 = vsel %vm331, %v325, 0
        %v417 = vsel %vm331, %v326, 0
        %v420 = vsel %vm331, %v327, 0
        %v423 = vsel %vm331, %v328, 0
        %v426 = vsel %vm331, %v329, 0
        %428 = vmatprep.subr.mxu0 0.0
        %429 = vmatpush1.msra.mxu0 %v330
        %430 = vmatprep.subr.mxu0 0.0
        %431 = vmatpush1.msra.mxu0 0.0
        %432 = vmatprep.subr.mxu0 0.0
        %433 = vmatpush1.msra.mxu0 0.0
        %434 = vmatprep.subr.mxu0 0.0
        %435 = vmatpush1.msra.mxu0 0.0
        %436 = vmatprep.subr.mxu0 0.0
        %437 = vmatpush1.msra.mxu0 0.0
        %438 = vmatprep.subr.mxu0 0.0
        %439 = vmatpush1.msra.mxu0 0.0
        %440 = vmatprep.subr.mxu0 0.0
        %441 = vmatpush1.msra.mxu0 0.0
        %442 = vmatprep.subr.mxu0 0.0
        %443 = vmatpush1.msra.mxu0 0.0
        %444 = vmatprep.subr.mxu0 0.0
        %445 = vmatpush1.msra.mxu0 0.0
        %446 = vmatprep.subr.mxu0 0.0
        %447 = vmatpush1.msra.mxu0 0.0
        %448 = vmatprep.subr.mxu0 0.0
        %449 = vmatpush1.msra.mxu0 0.0
        %450 = vmatprep.subr.mxu0 0.0
        %451 = vmatpush1.msra.mxu0 0.0
        %452 = vmatprep.subr.mxu0 0.0
        %453 = vmatpush1.msra.mxu0 0.0
        %454 = vmatprep.subr.mxu0 0.0
        %455 = vmatpush1.msra.mxu0 0.0
        %456 = vmatprep.subr.mxu0 0.0
        %457 = vmatpush1.msra.mxu0 0.0
        %458 = vmatprep.subr.mxu0 0.0
        %459 = vmatpush1.msra.mxu0 0.0
        %460 = vmatprep.subr.mxu0 0.0
        %461 = vmatpush1.msra.mxu0 0.0
        %462 = vmatprep.subr.mxu0 0.0
        %463 = vmatpush1.msra.mxu0 0.0
        %464 = vmatprep.subr.mxu0 0.0
        %465 = vmatpush1.msra.mxu0 0.0
        %466 = vmatprep.subr.mxu0 0.0
        %467 = vmatpush1.msra.mxu0 0.0
        %468 = vmatprep.subr.mxu0 0.0
        %469 = vmatpush1.msra.mxu0 0.0
        %470 = vmatprep.subr.mxu0 0.0
        %471 = vmatpush1.msra.mxu0 0.0
        %472 = vmatprep.subr.mxu0 0.0
        %473 = vmatpush1.msra.mxu0 0.0
        %474 = vmatprep.subr.mxu0 0.0
        %475 = vmatpush1.msra.mxu0 0.0
        %476 = vmatprep.subr.mxu0 0.0
        %477 = vmatpush1.msra.mxu0 0.0
        %478 = vmatprep.subr.mxu0 0.0
        %479 = vmatpush1.msra.mxu0 0.0
        %480 = vmatprep.subr.mxu0 0.0
        %481 = vmatpush1.msra.mxu0 0.0
        %482 = vmatprep.subr.mxu0 0.0
        %483 = vmatpush1.msra.mxu0 0.0
        %484 = vmatprep.subr.mxu0 0.0
        %485 = vmatpush1.msra.mxu0 0.0
        %486 = vmatprep.subr.mxu0 0.0
        %487 = vmatpush1.msra.mxu0 0.0
        %488 = vmatprep.subr.mxu0 0.0
        %489 = vmatpush1.msra.mxu0 0.0
        %490 = vmatprep.subr.mxu0 0.0
        %491 = vmatpush1.msra.mxu0 0.0
        %492 = vmatprep.mubr.f32.mxu0 0.0
        %493 = vmatmul.mubr.f32.gmra.mrb[0].mxu0 %v333
        %v494 = vpop.f32.mrb[0].mxu0
        %v495 = vadd.f32 0.0, %v494
        %v496 = vpop.f32.mrb[0].mxu0
        %497 = vmatprep.mubr.f32.mxu0 0.0
        %498 = vmatmul.mubr.f32.gmra.mrb[0].mxu0 %v336
        %v499 = vpop.f32.mrb[0].mxu0
        %v500 = vadd.f32 0.0, %v499
        %v501 = vpop.f32.mrb[0].mxu0
        %502 = vmatprep.mubr.f32.mxu0 0.0
        %503 = vmatmul.mubr.f32.gmra.mrb[0].mxu0 %v339
        %v504 = vpop.f32.mrb[0].mxu0
        %v505 = vadd.f32 0.0, %v504
        %v506 = vpop.f32.mrb[0].mxu0
        %507 = vmatprep.mubr.f32.mxu0 0.0
        %508 = vmatmul.mubr.f32.gmra.mrb[0].mxu0 %v342
        %v509 = vpop.f32.mrb[0].mxu0
        %v510 = vadd.f32 0.0, %v509
        %v511 = vpop.f32.mrb[0].mxu0
        %512 = vmatprep.mubr.f32.mxu0 0.0
        %513 = vmatmul.mubr.f32.gmra.mrb[0].mxu0 %v345
        %v514 = vpop.f32.mrb[0].mxu0
        %v515 = vadd.f32 0.0, %v514
        %v516 = vpop.f32.mrb[0].mxu0
        %517 = vmatprep.mubr.f32.mxu0 0.0
        %518 = vmatmul.mubr.f32.gmra.mrb[0].mxu0 %v348
        %v519 = vpop.f32.mrb[0].mxu0
        %v520 = vadd.f32 0.0, %v519
        %v521 = vpop.f32.mrb[0].mxu0
        %522 = vmatprep.mubr.f32.mxu0 0.0
        %523 = vmatmul.mubr.f32.gmra.mrb[0].mxu0 %v351
        %v524 = vpop.f32.mrb[0].mxu0
        %v525 = vadd.f32 0.0, %v524
        %v526 = vpop.f32.mrb[0].mxu0
        %527 = vmatprep.mubr.f32.mxu0 0.0
        %528 = vmatmul.mubr.f32.gmra.mrb[0].mxu0 %v354
        %v529 = vpop.f32.mrb[0].mxu0
        %v530 = vadd.f32 0.0, %v529
        %v531 = vpop.f32.mrb[0].mxu0
        %532 = vmatprep.mubr.f32.mxu0 0.0
        %533 = vmatmul.mubr.f32.gmra.mrb[0].mxu0 %v357
        %v534 = vpop.f32.mrb[0].mxu0
        %v535 = vadd.f32 0.0, %v534
        %v536 = vpop.f32.mrb[0].mxu0
        %537 = vmatprep.mubr.f32.mxu0 0.0
        %538 = vmatmul.mubr.f32.gmra.mrb[0].mxu0 %v360
        %v539 = vpop.f32.mrb[0].mxu0
        %v540 = vadd.f32 0.0, %v539
        %v541 = vpop.f32.mrb[0].mxu0
        %542 = vmatprep.mubr.f32.mxu0 0.0
        %543 = vmatmul.mubr.f32.gmra.mrb[0].mxu0 %v363
        %v544 = vpop.f32.mrb[0].mxu0
        %v545 = vadd.f32 0.0, %v544
        %v546 = vpop.f32.mrb[0].mxu0
        %547 = vmatprep.mubr.f32.mxu0 0.0
        %548 = vmatmul.mubr.f32.gmra.mrb[0].mxu0 %v366
        %v549 = vpop.f32.mrb[0].mxu0
        %v550 = vadd.f32 0.0, %v549
        %v551 = vpop.f32.mrb[0].mxu0
        %552 = vmatprep.mubr.f32.mxu0 0.0
        %553 = vmatmul.mubr.f32.gmra.mrb[0].mxu0 %v369
        %v554 = vpop.f32.mrb[0].mxu0
        %v555 = vadd.f32 0.0, %v554
        %v556 = vpop.f32.mrb[0].mxu0
        %557 = vmatprep.mubr.f32.mxu0 0.0
        %558 = vmatmul.mubr.f32.gmra.mrb[0].mxu0 %v372
        %v559 = vpop.f32.mrb[0].mxu0
        %v560 = vadd.f32 0.0, %v559
        %v561 = vpop.f32.mrb[0].mxu0
        %562 = vmatprep.mubr.f32.mxu0 0.0
        %563 = vmatmul.mubr.f32.gmra.mrb[0].mxu0 %v375
        %v564 = vpop.f32.mrb[0].mxu0
        %v565 = vadd.f32 0.0, %v564
        %v566 = vpop.f32.mrb[0].mxu0
        %567 = vmatprep.mubr.f32.mxu0 0.0
        %568 = vmatmul.mubr.f32.gmra.mrb[0].mxu0 %v378
        %v569 = vpop.f32.mrb[0].mxu0
        %v570 = vadd.f32 0.0, %v569
        %v571 = vpop.f32.mrb[0].mxu0
        %572 = vmatprep.mubr.f32.mxu0 0.0
        %573 = vmatmul.mubr.f32.gmra.mrb[0].mxu0 %v381
        %v574 = vpop.f32.mrb[0].mxu0
        %v575 = vadd.f32 0.0, %v574
        %v576 = vpop.f32.mrb[0].mxu0
        %577 = vmatprep.mubr.f32.mxu0 0.0
        %578 = vmatmul.mubr.f32.gmra.mrb[0].mxu0 %v384
        %v579 = vpop.f32.mrb[0].mxu0
        %v580 = vadd.f32 0.0, %v579
        %v581 = vpop.f32.mrb[0].mxu0
        %582 = vmatprep.mubr.f32.mxu0 0.0
        %583 = vmatmul.mubr.f32.gmra.mrb[0].mxu0 %v387
        %v584 = vpop.f32.mrb[0].mxu0
        %v585 = vadd.f32 0.0, %v584
        %v586 = vpop.f32.mrb[0].mxu0
        %587 = vmatprep.mubr.f32.mxu0 0.0
        %588 = vmatmul.mubr.f32.gmra.mrb[0].mxu0 %v390
        %v589 = vpop.f32.mrb[0].mxu0
        %v590 = vadd.f32 0.0, %v589
        %v591 = vpop.f32.mrb[0].mxu0
        %592 = vmatprep.mubr.f32.mxu0 0.0
        %593 = vmatmul.mubr.f32.gmra.mrb[0].mxu0 %v393
        %v594 = vpop.f32.mrb[0].mxu0
        %v595 = vadd.f32 0.0, %v594
        %v596 = vpop.f32.mrb[0].mxu0
        %597 = vmatprep.mubr.f32.mxu0 0.0
        %598 = vmatmul.mubr.f32.gmra.mrb[0].mxu0 %v396
        %v599 = vpop.f32.mrb[0].mxu0
        %v600 = vadd.f32 0.0, %v599
        %v601 = vpop.f32.mrb[0].mxu0
        %602 = vmatprep.mubr.f32.mxu0 0.0
        %603 = vmatmul.mubr.f32.gmra.mrb[0].mxu0 %v399
        %v604 = vpop.f32.mrb[0].mxu0
        %v605 = vadd.f32 0.0, %v604
        %v606 = vpop.f32.mrb[0].mxu0
        %607 = vmatprep.mubr.f32.mxu0 0.0
        %608 = vmatmul.mubr.f32.gmra.mrb[0].mxu0 %v402
        %v609 = vpop.f32.mrb[0].mxu0
        %v610 = vadd.f32 0.0, %v609
        %v611 = vpop.f32.mrb[0].mxu0
        %612 = vmatprep.mubr.f32.mxu0 0.0
        %613 = vmatmul.mubr.f32.gmra.mrb[0].mxu0 %v405
        %v614 = vpop.f32.mrb[0].mxu0
        %v615 = vadd.f32 0.0, %v614
        %v616 = vpop.f32.mrb[0].mxu0
        %617 = vmatprep.mubr.f32.mxu0 0.0
        %618 = vmatmul.mubr.f32.gmra.mrb[0].mxu0 %v408
        %v619 = vpop.f32.mrb[0].mxu0
        %v620 = vadd.f32 0.0, %v619
        %v621 = vpop.f32.mrb[0].mxu0
        %622 = vmatprep.mubr.f32.mxu0 0.0
        %623 = vmatmul.mubr.f32.gmra.mrb[0].mxu0 %v411
        %v624 = vpop.f32.mrb[0].mxu0
        %v625 = vadd.f32 0.0, %v624
        %v626 = vpop.f32.mrb[0].mxu0
        %627 = vmatprep.mubr.f32.mxu0 0.0
        %628 = vmatmul.mubr.f32.gmra.mrb[0].mxu0 %v414
        %v629 = vpop.f32.mrb[0].mxu0
        %v630 = vadd.f32 0.0, %v629
        %v631 = vpop.f32.mrb[0].mxu0
        %632 = vmatprep.mubr.f32.mxu0 0.0
        %633 = vmatmul.mubr.f32.gmra.mrb[0].mxu0 %v417
        %v634 = vpop.f32.mrb[0].mxu0
        %v635 = vadd.f32 0.0, %v634
        %v636 = vpop.f32.mrb[0].mxu0
        %637 = vmatprep.mubr.f32.mxu0 0.0
        %638 = vmatmul.mubr.f32.gmra.mrb[0].mxu0 %v420
        %v639 = vpop.f32.mrb[0].mxu0
        %v640 = vadd.f32 0.0, %v639
        %v641 = vpop.f32.mrb[0].mxu0
        %642 = vmatprep.mubr.f32.mxu0 0.0
        %643 = vmatmul.mubr.f32.gmra.mrb[0].mxu0 %v423
        %v644 = vpop.f32.mrb[0].mxu0
        %v645 = vadd.f32 0.0, %v644
        %v646 = vpop.f32.mrb[0].mxu0
        %647 = vmatprep.mubr.f32.mxu0 0.0
        %648 = vmatmul.mubr.f32.gmra.mrb[0].mxu0 %v426
        %v649 = vpop.f32.mrb[0].mxu0
        %v650 = vadd.f32 0.0, %v649
        %v651 = vpop.f32.mrb[0].mxu0
        %652 = vdwg.mxu0
        %v653 = vld [vmem:[#allocation2] sm:$0xff]
        %v654 = vld [vmem:[#allocation2 + $0x8] sm:$0xff]
        %v655 = vld [vmem:[#allocation2 + $0x10] sm:$0xff]
        %v656 = vld [vmem:[#allocation2 + $0x18] sm:$0xff]
        %v657 = vld [vmem:[#allocation2 + $0x20] sm:$0xff]
        %v658 = vld [vmem:[#allocation2 + $0x28] sm:$0xff]
        %v659 = vld [vmem:[#allocation2 + $0x30] sm:$0xff]
        %v660 = vld [vmem:[#allocation2 + $0x38] sm:$0xff]
        %v661 = vld [vmem:[#allocation2 + $0x40] sm:$0xff]
        %v662 = vld [vmem:[#allocation2 + $0x48] sm:$0xff]
        %v663 = vld [vmem:[#allocation2 + $0x50] sm:$0xff]
        %v664 = vld [vmem:[#allocation2 + $0x58] sm:$0xff]
        %v665 = vld [vmem:[#allocation2 + $0x60] sm:$0xff]
        %v666 = vld [vmem:[#allocation2 + $0x68] sm:$0xff]
        %v667 = vld [vmem:[#allocation2 + $0x70] sm:$0xff]
        %v668 = vld [vmem:[#allocation2 + $0x78] sm:$0xff]
        %v669 = vld [vmem:[#allocation2 + $0x80] sm:$0xff]
        %v670 = vld [vmem:[#allocation2 + $0x88] sm:$0xff]
        %v671 = vld [vmem:[#allocation2 + $0x90] sm:$0xff]
        %v672 = vld [vmem:[#allocation2 + $0x98] sm:$0xff]
        %v673 = vld [vmem:[#allocation2 + $0xa0] sm:$0xff]
        %v674 = vld [vmem:[#allocation2 + $0xa8] sm:$0xff]
        %v675 = vld [vmem:[#allocation2 + $0xb0] sm:$0xff]
        %v676 = vld [vmem:[#allocation2 + $0xb8] sm:$0xff]
        %v677 = vld [vmem:[#allocation2 + $0xc0] sm:$0xff]
        %v678 = vld [vmem:[#allocation2 + $0xc8] sm:$0xff]
        %v679 = vld [vmem:[#allocation2 + $0xd0] sm:$0xff]
        %v680 = vld [vmem:[#allocation2 + $0xd8] sm:$0xff]
        %v681 = vld [vmem:[#allocation2 + $0xe0] sm:$0xff]
        %v682 = vld [vmem:[#allocation2 + $0xe8] sm:$0xff]
        %v683 = vld [vmem:[#allocation2 + $0xf0] sm:$0xff]
        %v684 = vld [vmem:[#allocation2 + $0xf8] sm:$0xff]
        %v685 = vld [vmem:[%s216] sm:$0xff]
        %v686 = vld [vmem:[%s216 + $0x8] sm:$0xff]
        %v687 = vld [vmem:[%s216 + $0x10] sm:$0xff]
        %v688 = vld [vmem:[%s216 + $0x18] sm:$0xff]
        %v689 = vld [vmem:[%s216 + $0x20] sm:$0xff]
        %v690 = vld [vmem:[%s216 + $0x28] sm:$0xff]
        %v691 = vld [vmem:[%s216 + $0x30] sm:$0xff]
        %v692 = vld [vmem:[%s216 + $0x38] sm:$0xff]
        %v693 = vld [vmem:[%s216 + $0x40] sm:$0xff]
        %v694 = vld [vmem:[%s216 + $0x48] sm:$0xff]
        %v695 = vld [vmem:[%s216 + $0x50] sm:$0xff]
        %v696 = vld [vmem:[%s216 + $0x58] sm:$0xff]
        %v697 = vld [vmem:[%s216 + $0x60] sm:$0xff]
        %v698 = vld [vmem:[%s216 + $0x68] sm:$0xff]
        %v699 = vld [vmem:[%s216 + $0x70] sm:$0xff]
        %v700 = vld [vmem:[%s216 + $0x78] sm:$0xff]
        %v701 = vld [vmem:[%s216 + $0x80] sm:$0xff]
        %v702 = vld [vmem:[%s216 + $0x88] sm:$0xff]
        %v703 = vld [vmem:[%s216 + $0x90] sm:$0xff]
        %v704 = vld [vmem:[%s216 + $0x98] sm:$0xff]
        %v705 = vld [vmem:[%s216 + $0xa0] sm:$0xff]
        %v706 = vld [vmem:[%s216 + $0xa8] sm:$0xff]
        %v707 = vld [vmem:[%s216 + $0xb0] sm:$0xff]
        %v708 = vld [vmem:[%s216 + $0xb8] sm:$0xff]
        %v709 = vld [vmem:[%s216 + $0xc0] sm:$0xff]
        %v710 = vld [vmem:[%s216 + $0xc8] sm:$0xff]
        %v711 = vld [vmem:[%s216 + $0xd0] sm:$0xff]
        %v712 = vld [vmem:[%s216 + $0xd8] sm:$0xff]
        %v713 = vld [vmem:[%s216 + $0xe0] sm:$0xff]
        %v714 = vld [vmem:[%s216 + $0xe8] sm:$0xff]
        %v715 = vld [vmem:[%s216 + $0xf0] sm:$0xff]
        %v716 = vld [vmem:[%s216 + $0xf8] sm:$0xff]
        %v717 = vpack.c.bf16 %v500, %v495
        %v718 = vpack.c.bf16 %v510, %v505
        %v719 = vpack.c.bf16 %v520, %v515
        %v720 = vpack.c.bf16 %v530, %v525
        %v721 = vpack.c.bf16 %v540, %v535
        %v722 = vpack.c.bf16 %v550, %v545
        %v723 = vpack.c.bf16 %v560, %v555
        %v724 = vpack.c.bf16 %v570, %v565
        %v725 = vpack.c.bf16 %v580, %v575
        %v726 = vpack.c.bf16 %v590, %v585
        %v727 = vpack.c.bf16 %v600, %v595
        %v728 = vpack.c.bf16 %v610, %v605
        %v729 = vpack.c.bf16 %v620, %v615
        %v730 = vpack.c.bf16 %v630, %v625
        %v731 = vpack.c.bf16 %v640, %v635
        %v732 = vpack.c.bf16 %v650, %v645
        %v765 = vunpack.c.l.b16 %v685
        %v766 = vunpack.c.h.b16 %v685
        %v767 = vunpack.c.l.b16 %v686
        %v768 = vunpack.c.h.b16 %v686
        %v769 = vunpack.c.l.b16 %v687
        %v770 = vunpack.c.h.b16 %v687
        %v771 = vunpack.c.l.b16 %v688
        %v772 = vunpack.c.h.b16 %v688
        %v773 = vunpack.c.l.b16 %v689
        %v774 = vunpack.c.h.b16 %v689
        %v775 = vunpack.c.l.b16 %v690
        %v776 = vunpack.c.h.b16 %v690
        %v777 = vunpack.c.l.b16 %v691
        %v778 = vunpack.c.h.b16 %v691
        %v779 = vunpack.c.l.b16 %v692
        %v780 = vunpack.c.h.b16 %v692
        %v781 = vunpack.c.l.b16 %v693
        %v782 = vunpack.c.h.b16 %v693
        %v783 = vunpack.c.l.b16 %v694
        %v784 = vunpack.c.h.b16 %v694
        %v785 = vunpack.c.l.b16 %v695
        %v786 = vunpack.c.h.b16 %v695
        %v787 = vunpack.c.l.b16 %v696
        %v788 = vunpack.c.h.b16 %v696
        %v789 = vunpack.c.l.b16 %v697
        %v790 = vunpack.c.h.b16 %v697
        %v791 = vunpack.c.l.b16 %v698
        %v792 = vunpack.c.h.b16 %v698
        %v793 = vunpack.c.l.b16 %v699
        %v794 = vunpack.c.h.b16 %v699
        %v795 = vunpack.c.l.b16 %v700
        %v796 = vunpack.c.h.b16 %v700
        %v797 = vunpack.c.l.b16 %v701
        %v798 = vunpack.c.h.b16 %v701
        %v799 = vunpack.c.l.b16 %v702
        %v800 = vunpack.c.h.b16 %v702
        %v801 = vunpack.c.l.b16 %v703
        %v802 = vunpack.c.h.b16 %v703
        %v803 = vunpack.c.l.b16 %v704
        %v804 = vunpack.c.h.b16 %v704
        %v805 = vunpack.c.l.b16 %v705
        %v806 = vunpack.c.h.b16 %v705
        %v807 = vunpack.c.l.b16 %v706
        %v808 = vunpack.c.h.b16 %v706
        %v809 = vunpack.c.l.b16 %v707
        %v810 = vunpack.c.h.b16 %v707
        %v811 = vunpack.c.l.b16 %v708
        %v812 = vunpack.c.h.b16 %v708
        %v813 = vunpack.c.l.b16 %v709
        %v814 = vunpack.c.h.b16 %v709
        %v815 = vunpack.c.l.b16 %v710
        %v816 = vunpack.c.h.b16 %v710
        %v817 = vunpack.c.l.b16 %v711
        %v818 = vunpack.c.h.b16 %v711
        %v819 = vunpack.c.l.b16 %v712
        %v820 = vunpack.c.h.b16 %v712
        %v821 = vunpack.c.l.b16 %v713
        %v822 = vunpack.c.h.b16 %v713
        %v823 = vunpack.c.l.b16 %v714
        %v824 = vunpack.c.h.b16 %v714
        %v825 = vunpack.c.l.b16 %v715
        %v826 = vunpack.c.h.b16 %v715
        %v827 = vunpack.c.l.b16 %v716
        %v828 = vunpack.c.h.b16 %v716
        %v829 = vpack.c.b16 %v767, %v765
        %v830 = vpack.c.b16 %v768, %v766
        %v831 = vpack.c.b16 %v771, %v769
        %v832 = vpack.c.b16 %v772, %v770
        %v833 = vpack.c.b16 %v775, %v773
        %v834 = vpack.c.b16 %v776, %v774
        %v835 = vpack.c.b16 %v779, %v777
        %v836 = vpack.c.b16 %v780, %v778
        %v837 = vpack.c.b16 %v783, %v781
        %v838 = vpack.c.b16 %v784, %v782
        %v839 = vpack.c.b16 %v787, %v785
        %v840 = vpack.c.b16 %v788, %v786
        %v841 = vpack.c.b16 %v791, %v789
        %v842 = vpack.c.b16 %v792, %v790
        %v843 = vpack.c.b16 %v795, %v793
        %v844 = vpack.c.b16 %v796, %v794
        %v845 = vpack.c.b16 %v799, %v797
        %v846 = vpack.c.b16 %v800, %v798
        %v847 = vpack.c.b16 %v803, %v801
        %v848 = vpack.c.b16 %v804, %v802
        %v849 = vpack.c.b16 %v807, %v805
        %v850 = vpack.c.b16 %v808, %v806
        %v851 = vpack.c.b16 %v811, %v809
        %v852 = vpack.c.b16 %v812, %v810
        %v853 = vpack.c.b16 %v815, %v813
        %v854 = vpack.c.b16 %v816, %v814
        %v855 = vpack.c.b16 %v819, %v817
        %v856 = vpack.c.b16 %v820, %v818
        %v857 = vpack.c.b16 %v823, %v821
        %v858 = vpack.c.b16 %v824, %v822
        %v859 = vpack.c.b16 %v827, %v825
        %v860 = vpack.c.b16 %v828, %v826
        %893 = vmatprep.subr.bf16.mxu0 0
        %894 = vmatpush1.bf16.msra.mxu0 %v717
        %895 = vmatprep.subr.bf16.mxu0 0
        %896 = vmatpush1.bf16.msra.mxu0 %v718
        %897 = vmatprep.subr.bf16.mxu0 0
        %898 = vmatpush1.bf16.msra.mxu0 %v719
        %899 = vmatprep.subr.bf16.mxu0 0
        %900 = vmatpush1.bf16.msra.mxu0 %v720
        %901 = vmatprep.subr.bf16.mxu0 0
        %902 = vmatpush1.bf16.msra.mxu0 %v721
        %903 = vmatprep.subr.bf16.mxu0 0
        %904 = vmatpush1.bf16.msra.mxu0 %v722
        %905 = vmatprep.subr.bf16.mxu0 0
        %906 = vmatpush1.bf16.msra.mxu0 %v723
        %907 = vmatprep.subr.bf16.mxu0 0
        %908 = vmatpush1.bf16.msra.mxu0 %v724
        %909 = vmatprep.subr.bf16.mxu0 0
        %910 = vmatpush1.bf16.msra.mxu0 %v725
        %911 = vmatprep.subr.bf16.mxu0 0
        %912 = vmatpush1.bf16.msra.mxu0 %v726
        %913 = vmatprep.subr.bf16.mxu0 0
        %914 = vmatpush1.bf16.msra.mxu0 %v727
        %915 = vmatprep.subr.bf16.mxu0 0
        %916 = vmatpush1.bf16.msra.mxu0 %v728
        %917 = vmatprep.subr.bf16.mxu0 0
        %918 = vmatpush1.bf16.msra.mxu0 %v729
        %919 = vmatprep.subr.bf16.mxu0 0
        %920 = vmatpush1.bf16.msra.mxu0 %v730
        %921 = vmatprep.subr.bf16.mxu0 0
        %922 = vmatpush1.bf16.msra.mxu0 %v731
        %923 = vmatprep.subr.bf16.mxu0 0
        %924 = vmatpush1.bf16.msra.mxu0 %v732
        %925 = vmatprep.mubr.bf16.mxu0 %v830
        %926 = vmatmul.mubr.bf16.gmra.mrb[0].mxu0 %v829
        %v927 = vpop.f32.mrb[0].mxu0
        %v928 = vadd.f32 0.0, %v927
        %v929 = vpop.f32.mrb[0].mxu0
        %v930 = vpop.f32.mrb[0].mxu0
        %v931 = vadd.f32 0.0, %v930
        %v932 = vpop.f32.mrb[0].mxu0
        %933 = vmatprep.mubr.bf16.mxu0 %v832
        %934 = vmatmul.mubr.bf16.gmra.mrb[0].mxu0 %v831
        %v935 = vpop.f32.mrb[0].mxu0
        %v936 = vadd.f32 0.0, %v935
        %v937 = vpop.f32.mrb[0].mxu0
        %v938 = vpop.f32.mrb[0].mxu0
        %v939 = vadd.f32 0.0, %v938
        %v940 = vpop.f32.mrb[0].mxu0
        %941 = vmatprep.mubr.bf16.mxu0 %v834
        %942 = vmatmul.mubr.bf16.gmra.mrb[0].mxu0 %v833
        %v943 = vpop.f32.mrb[0].mxu0
        %v944 = vadd.f32 0.0, %v943
        %v945 = vpop.f32.mrb[0].mxu0
        %v946 = vpop.f32.mrb[0].mxu0
        %v947 = vadd.f32 0.0, %v946
        %v948 = vpop.f32.mrb[0].mxu0
        %949 = vmatprep.mubr.bf16.mxu0 %v836
        %950 = vmatmul.mubr.bf16.gmra.mrb[0].mxu0 %v835
        %v951 = vpop.f32.mrb[0].mxu0
        %v952 = vadd.f32 0.0, %v951
        %v953 = vpop.f32.mrb[0].mxu0
        %v954 = vpop.f32.mrb[0].mxu0
        %v955 = vadd.f32 0.0, %v954
        %v956 = vpop.f32.mrb[0].mxu0
        %957 = vmatprep.mubr.bf16.mxu0 %v838
        %958 = vmatmul.mubr.bf16.gmra.mrb[0].mxu0 %v837
        %v959 = vpop.f32.mrb[0].mxu0
        %v960 = vadd.f32 0.0, %v959
        %v961 = vpop.f32.mrb[0].mxu0
        %v962 = vpop.f32.mrb[0].mxu0
        %v963 = vadd.f32 0.0, %v962
        %v964 = vpop.f32.mrb[0].mxu0
        %965 = vmatprep.mubr.bf16.mxu0 %v840
        %966 = vmatmul.mubr.bf16.gmra.mrb[0].mxu0 %v839
        %v967 = vpop.f32.mrb[0].mxu0
        %v968 = vadd.f32 0.0, %v967
        %v969 = vpop.f32.mrb[0].mxu0
        %v970 = vpop.f32.mrb[0].mxu0
        %v971 = vadd.f32 0.0, %v970
        %v972 = vpop.f32.mrb[0].mxu0
        %973 = vmatprep.mubr.bf16.mxu0 %v842
        %974 = vmatmul.mubr.bf16.gmra.mrb[0].mxu0 %v841
        %v975 = vpop.f32.mrb[0].mxu0
        %v976 = vadd.f32 0.0, %v975
        %v977 = vpop.f32.mrb[0].mxu0
        %v978 = vpop.f32.mrb[0].mxu0
        %v979 = vadd.f32 0.0, %v978
        %v980 = vpop.f32.mrb[0].mxu0
        %981 = vmatprep.mubr.bf16.mxu0 %v844
        %982 = vmatmul.mubr.bf16.gmra.mrb[0].mxu0 %v843
        %v983 = vpop.f32.mrb[0].mxu0
        %v984 = vadd.f32 0.0, %v983
        %v985 = vpop.f32.mrb[0].mxu0
        %v986 = vpop.f32.mrb[0].mxu0
        %v987 = vadd.f32 0.0, %v986
        %v988 = vpop.f32.mrb[0].mxu0
        %989 = vmatprep.mubr.bf16.mxu0 %v846
        %990 = vmatmul.mubr.bf16.gmra.mrb[0].mxu0 %v845
        %v991 = vpop.f32.mrb[0].mxu0
        %v992 = vadd.f32 0.0, %v991
        %v993 = vpop.f32.mrb[0].mxu0
        %v994 = vpop.f32.mrb[0].mxu0
        %v995 = vadd.f32 0.0, %v994
        %v996 = vpop.f32.mrb[0].mxu0
        %997 = vmatprep.mubr.bf16.mxu0 %v848
        %998 = vmatmul.mubr.bf16.gmra.mrb[0].mxu0 %v847
        %v999 = vpop.f32.mrb[0].mxu0
        %v1000 = vadd.f32 0.0, %v999
        %v1001 = vpop.f32.mrb[0].mxu0
        %v1002 = vpop.f32.mrb[0].mxu0
        %v1003 = vadd.f32 0.0, %v1002
        %v1004 = vpop.f32.mrb[0].mxu0
        %1005 = vmatprep.mubr.bf16.mxu0 %v850
        %1006 = vmatmul.mubr.bf16.gmra.mrb[0].mxu0 %v849
        %v1007 = vpop.f32.mrb[0].mxu0
        %v1008 = vadd.f32 0.0, %v1007
        %v1009 = vpop.f32.mrb[0].mxu0
        %v1010 = vpop.f32.mrb[0].mxu0
        %v1011 = vadd.f32 0.0, %v1010
        %v1012 = vpop.f32.mrb[0].mxu0
        %1013 = vmatprep.mubr.bf16.mxu0 %v852
        %1014 = vmatmul.mubr.bf16.gmra.mrb[0].mxu0 %v851
        %v1015 = vpop.f32.mrb[0].mxu0
        %v1016 = vadd.f32 0.0, %v1015
        %v1017 = vpop.f32.mrb[0].mxu0
        %v1018 = vpop.f32.mrb[0].mxu0
        %v1019 = vadd.f32 0.0, %v1018
        %v1020 = vpop.f32.mrb[0].mxu0
        %1021 = vmatprep.mubr.bf16.mxu0 %v854
        %1022 = vmatmul.mubr.bf16.gmra.mrb[0].mxu0 %v853
        %v1023 = vpop.f32.mrb[0].mxu0
        %v1024 = vadd.f32 0.0, %v1023
        %v1025 = vpop.f32.mrb[0].mxu0
        %v1026 = vpop.f32.mrb[0].mxu0
        %v1027 = vadd.f32 0.0, %v1026
        %v1028 = vpop.f32.mrb[0].mxu0
        %1029 = vmatprep.mubr.bf16.mxu0 %v856
        %1030 = vmatmul.mubr.bf16.gmra.mrb[0].mxu0 %v855
        %v1031 = vpop.f32.mrb[0].mxu0
        %v1032 = vadd.f32 0.0, %v1031
        %v1033 = vpop.f32.mrb[0].mxu0
        %v1034 = vpop.f32.mrb[0].mxu0
        %v1035 = vadd.f32 0.0, %v1034
        %v1036 = vpop.f32.mrb[0].mxu0
        %1037 = vmatprep.mubr.bf16.mxu0 %v858
        %1038 = vmatmul.mubr.bf16.gmra.mrb[0].mxu0 %v857
        %v1039 = vpop.f32.mrb[0].mxu0
        %v1040 = vadd.f32 0.0, %v1039
        %v1041 = vpop.f32.mrb[0].mxu0
        %v1042 = vpop.f32.mrb[0].mxu0
        %v1043 = vadd.f32 0.0, %v1042
        %v1044 = vpop.f32.mrb[0].mxu0
        %1045 = vmatprep.mubr.bf16.mxu0 %v860
        %1046 = vmatmul.mubr.bf16.gmra.mrb[0].mxu0 %v859
        %v1047 = vpop.f32.mrb[0].mxu0
        %v1048 = vadd.f32 0.0, %v1047
        %v1049 = vpop.f32.mrb[0].mxu0
        %v1050 = vpop.f32.mrb[0].mxu0
        %v1051 = vadd.f32 0.0, %v1050
        %v1052 = vpop.f32.mrb[0].mxu0
        %1053 = vdwg.mxu0
        %v1054 = vadd.f32 %v653, %v928
        %v1055 = vadd.f32 %v654, %v931
        %v1056 = vadd.f32 %v655, %v936
        %v1057 = vadd.f32 %v656, %v939
        %v1058 = vadd.f32 %v657, %v944
        %v1059 = vadd.f32 %v658, %v947
        %v1060 = vadd.f32 %v659, %v952
        %v1061 = vadd.f32 %v660, %v955
        %v1062 = vadd.f32 %v661, %v960
        %v1063 = vadd.f32 %v662, %v963
        %v1064 = vadd.f32 %v663, %v968
        %v1065 = vadd.f32 %v664, %v971
        %v1066 = vadd.f32 %v665, %v976
        %v1067 = vadd.f32 %v666, %v979
        %v1068 = vadd.f32 %v667, %v984
        %v1069 = vadd.f32 %v668, %v987
        %v1070 = vadd.f32 %v669, %v992
        %v1071 = vadd.f32 %v670, %v995
        %v1072 = vadd.f32 %v671, %v1000
        %v1073 = vadd.f32 %v672, %v1003
        %v1074 = vadd.f32 %v673, %v1008
        %v1075 = vadd.f32 %v674, %v1011
        %v1076 = vadd.f32 %v675, %v1016
        %v1077 = vadd.f32 %v676, %v1019
        %v1078 = vadd.f32 %v677, %v1024
        %v1079 = vadd.f32 %v678, %v1027
        %v1080 = vadd.f32 %v679, %v1032
        %v1081 = vadd.f32 %v680, %v1035
        %v1082 = vadd.f32 %v681, %v1040
        %v1083 = vadd.f32 %v682, %v1043
        %v1084 = vadd.f32 %v683, %v1048
        %v1085 = vadd.f32 %v684, %v1051
        %1086 = vst.msk [vmem:[#allocation2] sm:$0xff] %vm331, %v1054
        %1087 = vst.msk [vmem:[#allocation2 + $0x8] sm:$0xff] %vm331, %v1055
        %1088 = vst.msk [vmem:[#allocation2 + $0x10] sm:$0xff] %vm331, %v1056
        %1089 = vst.msk [vmem:[#allocation2 + $0x18] sm:$0xff] %vm331, %v1057
        %1090 = vst.msk [vmem:[#allocation2 + $0x20] sm:$0xff] %vm331, %v1058
        %1091 = vst.msk [vmem:[#allocation2 + $0x28] sm:$0xff] %vm331, %v1059
        %1092 = vst.msk [vmem:[#allocation2 + $0x30] sm:$0xff] %vm331, %v1060
        %1093 = vst.msk [vmem:[#allocation2 + $0x38] sm:$0xff] %vm331, %v1061
        %1094 = vst.msk [vmem:[#allocation2 + $0x40] sm:$0xff] %vm331, %v1062
        %1095 = vst.msk [vmem:[#allocation2 + $0x48] sm:$0xff] %vm331, %v1063
        %1096 = vst.msk [vmem:[#allocation2 + $0x50] sm:$0xff] %vm331, %v1064
        %1097 = vst.msk [vmem:[#allocation2 + $0x58] sm:$0xff] %vm331, %v1065
        %1098 = vst.msk [vmem:[#allocation2 + $0x60] sm:$0xff] %vm331, %v1066
        %1099 = vst.msk [vmem:[#allocation2 + $0x68] sm:$0xff] %vm331, %v1067
        %1100 = vst.msk [vmem:[#allocation2 + $0x70] sm:$0xff] %vm331, %v1068
        %1101 = vst.msk [vmem:[#allocation2 + $0x78] sm:$0xff] %vm331, %v1069
        %1102 = vst.msk [vmem:[#allocation2 + $0x80] sm:$0xff] %vm331, %v1070
        %1103 = vst.msk [vmem:[#allocation2 + $0x88] sm:$0xff] %vm331, %v1071
        %1104 = vst.msk [vmem:[#allocation2 + $0x90] sm:$0xff] %vm331, %v1072
        %1105 = vst.msk [vmem:[#allocation2 + $0x98] sm:$0xff] %vm331, %v1073
        %1106 = vst.msk [vmem:[#allocation2 + $0xa0] sm:$0xff] %vm331, %v1074
        %1107 = vst.msk [vmem:[#allocation2 + $0xa8] sm:$0xff] %vm331, %v1075
        %1108 = vst.msk [vmem:[#allocation2 + $0xb0] sm:$0xff] %vm331, %v1076
        %1109 = vst.msk [vmem:[#allocation2 + $0xb8] sm:$0xff] %vm331, %v1077
        %1110 = vst.msk [vmem:[#allocation2 + $0xc0] sm:$0xff] %vm331, %v1078
        %1111 = vst.msk [vmem:[#allocation2 + $0xc8] sm:$0xff] %vm331, %v1079
        %1112 = vst.msk [vmem:[#allocation2 + $0xd0] sm:$0xff] %vm331, %v1080
        %1113 = vst.msk [vmem:[#allocation2 + $0xd8] sm:$0xff] %vm331, %v1081
        %1114 = vst.msk [vmem:[#allocation2 + $0xe0] sm:$0xff] %vm331, %v1082
        %1115 = vst.msk [vmem:[#allocation2 + $0xe8] sm:$0xff] %vm331, %v1083
        %1116 = vst.msk [vmem:[#allocation2 + $0xf0] sm:$0xff] %vm331, %v1084
        %1117 = vst.msk [vmem:[#allocation2 + $0xf8] sm:$0xff] %vm331, %v1085
        %p1118 = scmp.eq.s32.totalorder %s23, 1
        // Predicated region
        $region45: #{tpu_custom_call.1} parent=35 // pred_check
          %p1119 = pneg %p1118
        $region46: #{tpu_custom_call.1} parent=35 // pred_check_branch
          %1121 = sbr.rel (%p1119) target = $region48
        $region47: #{tpu_custom_call.1} parent=35 // pred_region
          %v1122 = vld [vmem:[%s3] sm:$0x1]
          %v1123 = vld [vmem:[%s3 + $0x1] sm:$0x1]
          %v1124 = vld [vmem:[#allocation2] sm:$0xff]
          %v1125 = vld [vmem:[#allocation2 + $0x8] sm:$0xff]
          %v1126 = vld [vmem:[#allocation2 + $0x10] sm:$0xff]
          %v1127 = vld [vmem:[#allocation2 + $0x18] sm:$0xff]
          %v1128 = vld [vmem:[#allocation2 + $0x20] sm:$0xff]
          %v1129 = vld [vmem:[#allocation2 + $0x28] sm:$0xff]
          %v1130 = vld [vmem:[#allocation2 + $0x30] sm:$0xff]
          %v1131 = vld [vmem:[#allocation2 + $0x38] sm:$0xff]
          %v1132 = vld [vmem:[#allocation2 + $0x40] sm:$0xff]
          %v1133 = vld [vmem:[#allocation2 + $0x48] sm:$0xff]
          %v1134 = vld [vmem:[#allocation2 + $0x50] sm:$0xff]
          %v1135 = vld [vmem:[#allocation2 + $0x58] sm:$0xff]
          %v1136 = vld [vmem:[#allocation2 + $0x60] sm:$0xff]
          %v1137 = vld [vmem:[#allocation2 + $0x68] sm:$0xff]
          %v1138 = vld [vmem:[#allocation2 + $0x70] sm:$0xff]
          %v1139 = vld [vmem:[#allocation2 + $0x78] sm:$0xff]
          %v1140 = vld [vmem:[#allocation2 + $0x80] sm:$0xff]
          %v1141 = vld [vmem:[#allocation2 + $0x88] sm:$0xff]
          %v1142 = vld [vmem:[#allocation2 + $0x90] sm:$0xff]
          %v1143 = vld [vmem:[#allocation2 + $0x98] sm:$0xff]
          %v1144 = vld [vmem:[#allocation2 + $0xa0] sm:$0xff]
          %v1145 = vld [vmem:[#allocation2 + $0xa8] sm:$0xff]
          %v1146 = vld [vmem:[#allocation2 + $0xb0] sm:$0xff]
          %v1147 = vld [vmem:[#allocation2 + $0xb8] sm:$0xff]
          %v1148 = vld [vmem:[#allocation2 + $0xc0] sm:$0xff]
          %v1149 = vld [vmem:[#allocation2 + $0xc8] sm:$0xff]
          %v1150 = vld [vmem:[#allocation2 + $0xd0] sm:$0xff]
          %v1151 = vld [vmem:[#allocation2 + $0xd8] sm:$0xff]
          %v1152 = vld [vmem:[#allocation2 + $0xe0] sm:$0xff]
          %v1153 = vld [vmem:[#allocation2 + $0xe8] sm:$0xff]
          %v1154 = vld [vmem:[#allocation2 + $0xf0] sm:$0xff]
          %v1155 = vld [vmem:[#allocation2 + $0xf8] sm:$0xff]
          %v1156 = vlaneseq
          %v1157 = vshrl.u32 %v1156, 7
          %v1158 = vsub.s32 0, %v1157
          %v1159 = vrot.slane %v1122, %v1158
          %v1160 = vadd.f32 %v1124, %v1159
          %v1161 = vadd.f32 %v1125, %v1159
          %v1162 = vadd.f32 %v1126, %v1159
          %v1163 = vadd.f32 %v1127, %v1159
          %v1164 = vadd.f32 %v1128, %v1159
          %v1165 = vadd.f32 %v1129, %v1159
          %v1166 = vadd.f32 %v1130, %v1159
          %v1167 = vadd.f32 %v1131, %v1159
          %v1168 = vadd.f32 %v1132, %v1159
          %v1169 = vadd.f32 %v1133, %v1159
          %v1170 = vadd.f32 %v1134, %v1159
          %v1171 = vadd.f32 %v1135, %v1159
          %v1172 = vadd.f32 %v1136, %v1159
          %v1173 = vadd.f32 %v1137, %v1159
          %v1174 = vadd.f32 %v1138, %v1159
          %v1175 = vadd.f32 %v1139, %v1159
          %v1176 = vadd.f32 %v1140, %v1159
          %v1177 = vadd.f32 %v1141, %v1159
          %v1178 = vadd.f32 %v1142, %v1159
          %v1179 = vadd.f32 %v1143, %v1159
          %v1180 = vadd.f32 %v1144, %v1159
          %v1181 = vadd.f32 %v1145, %v1159
          %v1182 = vadd.f32 %v1146, %v1159
          %v1183 = vadd.f32 %v1147, %v1159
          %v1184 = vadd.f32 %v1148, %v1159
          %v1185 = vadd.f32 %v1149, %v1159
          %v1186 = vadd.f32 %v1150, %v1159
          %v1187 = vadd.f32 %v1151, %v1159
          %v1188 = vadd.f32 %v1152, %v1159
          %v1189 = vadd.f32 %v1153, %v1159
          %v1190 = vadd.f32 %v1154, %v1159
          %v1191 = vadd.f32 %v1155, %v1159
          %vm1192 = vcmp.ge.f32.partialorder %v1160, 0.0
          %vm1193 = vcmp.ge.f32.partialorder %v1161, 0.0
          %vm1194 = vcmp.ge.f32.partialorder %v1162, 0.0
          %vm1195 = vcmp.ge.f32.partialorder %v1163, 0.0
          %vm1196 = vcmp.ge.f32.partialorder %v1164, 0.0
          %vm1197 = vcmp.ge.f32.partialorder %v1165, 0.0
          %vm1198 = vcmp.ge.f32.partialorder %v1166, 0.0
          %vm1199 = vcmp.ge.f32.partialorder %v1167, 0.0
          %vm1200 = vcmp.ge.f32.partialorder %v1168, 0.0
          %vm1201 = vcmp.ge.f32.partialorder %v1169, 0.0
          %vm1202 = vcmp.ge.f32.partialorder %v1170, 0.0
          %vm1203 = vcmp.ge.f32.partialorder %v1171, 0.0
          %vm1204 = vcmp.ge.f32.partialorder %v1172, 0.0
          %vm1205 = vcmp.ge.f32.partialorder %v1173, 0.0
          %vm1206 = vcmp.ge.f32.partialorder %v1174, 0.0
          %vm1207 = vcmp.ge.f32.partialorder %v1175, 0.0
          %vm1208 = vcmp.ge.f32.partialorder %v1176, 0.0
          %vm1209 = vcmp.ge.f32.partialorder %v1177, 0.0
          %vm1210 = vcmp.ge.f32.partialorder %v1178, 0.0
          %vm1211 = vcmp.ge.f32.partialorder %v1179, 0.0
          %vm1212 = vcmp.ge.f32.partialorder %v1180, 0.0
          %vm1213 = vcmp.ge.f32.partialorder %v1181, 0.0
          %vm1214 = vcmp.ge.f32.partialorder %v1182, 0.0
          %vm1215 = vcmp.ge.f32.partialorder %v1183, 0.0
          %vm1216 = vcmp.ge.f32.partialorder %v1184, 0.0
          %vm1217 = vcmp.ge.f32.partialorder %v1185, 0.0
          %vm1218 = vcmp.ge.f32.partialorder %v1186, 0.0
          %vm1219 = vcmp.ge.f32.partialorder %v1187, 0.0
          %vm1220 = vcmp.ge.f32.partialorder %v1188, 0.0
          %vm1221 = vcmp.ge.f32.partialorder %v1189, 0.0
          %vm1222 = vcmp.ge.f32.partialorder %v1190, 0.0
          %vm1223 = vcmp.ge.f32.partialorder %v1191, 0.0
          %v1224 = vlaneseq
          %v1225 = vshrl.u32 %v1224, 7
          %v1226 = vsub.s32 0, %v1225
          %v1227 = vrot.slane %v1123, %v1226
          %v1228 = vmul.f32 %v1227, %v1160
          %v1229 = vmul.f32 %v1227, %v1161
          %v1230 = vmul.f32 %v1227, %v1162
          %v1231 = vmul.f32 %v1227, %v1163
          %v1232 = vmul.f32 %v1227, %v1164
          %v1233 = vmul.f32 %v1227, %v1165
          %v1234 = vmul.f32 %v1227, %v1166
          %v1235 = vmul.f32 %v1227, %v1167
          %v1236 = vmul.f32 %v1227, %v1168
          %v1237 = vmul.f32 %v1227, %v1169
          %v1238 = vmul.f32 %v1227, %v1170
          %v1239 = vmul.f32 %v1227, %v1171
          %v1240 = vmul.f32 %v1227, %v1172
          %v1241 = vmul.f32 %v1227, %v1173
          %v1242 = vmul.f32 %v1227, %v1174
          %v1243 = vmul.f32 %v1227, %v1175
          %v1244 = vmul.f32 %v1227, %v1176
          %v1245 = vmul.f32 %v1227, %v1177
          %v1246 = vmul.f32 %v1227, %v1178
          %v1247 = vmul.f32 %v1227, %v1179
          %v1248 = vmul.f32 %v1227, %v1180
          %v1249 = vmul.f32 %v1227, %v1181
          %v1250 = vmul.f32 %v1227, %v1182
          %v1251 = vmul.f32 %v1227, %v1183
          %v1252 = vmul.f32 %v1227, %v1184
          %v1253 = vmul.f32 %v1227, %v1185
          %v1254 = vmul.f32 %v1227, %v1186
          %v1255 = vmul.f32 %v1227, %v1187
          %v1256 = vmul.f32 %v1227, %v1188
          %v1257 = vmul.f32 %v1227, %v1189
          %v1258 = vmul.f32 %v1227, %v1190
          %v1259 = vmul.f32 %v1227, %v1191
          %v1260 = vsel %vm1192, %v1160, %v1228
          %v1261 = vsel %vm1193, %v1161, %v1229
          %v1262 = vsel %vm1194, %v1162, %v1230
          %v1263 = vsel %vm1195, %v1163, %v1231
          %v1264 = vsel %vm1196, %v1164, %v1232
          %v1265 = vsel %vm1197, %v1165, %v1233
          %v1266 = vsel %vm1198, %v1166, %v1234
          %v1267 = vsel %vm1199, %v1167, %v1235
          %v1268 = vsel %vm1200, %v1168, %v1236
          %v1269 = vsel %vm1201, %v1169, %v1237
          %v1270 = vsel %vm1202, %v1170, %v1238
          %v1271 = vsel %vm1203, %v1171, %v1239
          %v1272 = vsel %vm1204, %v1172, %v1240
          %v1273 = vsel %vm1205, %v1173, %v1241
          %v1274 = vsel %vm1206, %v1174, %v1242
          %v1275 = vsel %vm1207, %v1175, %v1243
          %v1276 = vsel %vm1208, %v1176, %v1244
          %v1277 = vsel %vm1209, %v1177, %v1245
          %v1278 = vsel %vm1210, %v1178, %v1246
          %v1279 = vsel %vm1211, %v1179, %v1247
          %v1280 = vsel %vm1212, %v1180, %v1248
          %v1281 = vsel %vm1213, %v1181, %v1249
          %v1282 = vsel %vm1214, %v1182, %v1250
          %v1283 = vsel %vm1215, %v1183, %v1251
          %v1284 = vsel %vm1216, %v1184, %v1252
          %v1285 = vsel %vm1217, %v1185, %v1253
          %v1286 = vsel %vm1218, %v1186, %v1254
          %v1287 = vsel %vm1219, %v1187, %v1255
          %v1288 = vsel %vm1220, %v1188, %v1256
          %v1289 = vsel %vm1221, %v1189, %v1257
          %v1290 = vsel %vm1222, %v1190, %v1258
          %v1291 = vsel %vm1223, %v1191, %v1259
          %1292 = vst.msk [vmem:[%s258] sm:$0xff] %vm331, %v1260
          %1293 = vst.msk [vmem:[%s258 + $0x8] sm:$0xff] %vm331, %v1261
          %1294 = vst.msk [vmem:[%s258 + $0x10] sm:$0xff] %vm331, %v1262
          %1295 = vst.msk [vmem:[%s258 + $0x18] sm:$0xff] %vm331, %v1263
          %1296 = vst.msk [vmem:[%s258 + $0x20] sm:$0xff] %vm331, %v1264
          %1297 = vst.msk [vmem:[%s258 + $0x28] sm:$0xff] %vm331, %v1265
          %1298 = vst.msk [vmem:[%s258 + $0x30] sm:$0xff] %vm331, %v1266
          %1299 = vst.msk [vmem:[%s258 + $0x38] sm:$0xff] %vm331, %v1267
          %1300 = vst.msk [vmem:[%s258 + $0x40] sm:$0xff] %vm331, %v1268
          %1301 = vst.msk [vmem:[%s258 + $0x48] sm:$0xff] %vm331, %v1269
          %1302 = vst.msk [vmem:[%s258 + $0x50] sm:$0xff] %vm331, %v1270
          %1303 = vst.msk [vmem:[%s258 + $0x58] sm:$0xff] %vm331, %v1271
          %1304 = vst.msk [vmem:[%s258 + $0x60] sm:$0xff] %vm331, %v1272
          %1305 = vst.msk [vmem:[%s258 + $0x68] sm:$0xff] %vm331, %v1273
          %1306 = vst.msk [vmem:[%s258 + $0x70] sm:$0xff] %vm331, %v1274
          %1307 = vst.msk [vmem:[%s258 + $0x78] sm:$0xff] %vm331, %v1275
          %1308 = vst.msk [vmem:[%s258 + $0x80] sm:$0xff] %vm331, %v1276
          %1309 = vst.msk [vmem:[%s258 + $0x88] sm:$0xff] %vm331, %v1277
          %1310 = vst.msk [vmem:[%s258 + $0x90] sm:$0xff] %vm331, %v1278
          %1311 = vst.msk [vmem:[%s258 + $0x98] sm:$0xff] %vm331, %v1279
          %1312 = vst.msk [vmem:[%s258 + $0xa0] sm:$0xff] %vm331, %v1280
          %1313 = vst.msk [vmem:[%s258 + $0xa8] sm:$0xff] %vm331, %v1281
          %1314 = vst.msk [vmem:[%s258 + $0xb0] sm:$0xff] %vm331, %v1282
          %1315 = vst.msk [vmem:[%s258 + $0xb8] sm:$0xff] %vm331, %v1283
          %1316 = vst.msk [vmem:[%s258 + $0xc0] sm:$0xff] %vm331, %v1284
          %1317 = vst.msk [vmem:[%s258 + $0xc8] sm:$0xff] %vm331, %v1285
          %1318 = vst.msk [vmem:[%s258 + $0xd0] sm:$0xff] %vm331, %v1286
          %1319 = vst.msk [vmem:[%s258 + $0xd8] sm:$0xff] %vm331, %v1287
          %1320 = vst.msk [vmem:[%s258 + $0xe0] sm:$0xff] %vm331, %v1288
          %1321 = vst.msk [vmem:[%s258 + $0xe8] sm:$0xff] %vm331, %v1289
          %1322 = vst.msk [vmem:[%s258 + $0xf0] sm:$0xff] %vm331, %v1290
          %1323 = vst.msk [vmem:[%s258 + $0xf8] sm:$0xff] %vm331, %v1291
        $region48: #{tpu_custom_call.1} parent=35 // pred_fallthru
          _
        %s1324 = smul.u32 32, %s22
        %p1325 = scmp.lt.s32.totalorder %s1324, 63
        %s1326 = scalar_select %p1325, %s1324, 63
        %s1327 = smul.addr %s1326, 8
        %s1328 = scalar_lea.vmem %s4, %s1327
        // Predicated region
        $region49: #{tpu_custom_call.1} parent=35 // pred_check
          %p1329 = pneg %p144
        $region50: #{tpu_custom_call.1} parent=35 // pred_check_branch
          %1331 = sbr.rel (%p1329) target = $region52
        $region51: #{tpu_custom_call.1} parent=35 // pred_region
          %s1332 = smul.u32 32, %s22
        $region52: #{tpu_custom_call.1} parent=35 // pred_fallthru
          _
      $region36: #{tpu_custom_call.1} parent=5 // pred_fallthru
        _
      %p1333 = scmp.le.s32.totalorder 2, %s13
      // Predicated region
      $region53: #{tpu_custom_call.1} parent=5 // pred_check
        %p1334 = pneg %p1333
      $region54: #{tpu_custom_call.1} parent=5 // pred_check_branch
        %1336 = sbr.rel (%p1334) target = $region56
      $region55: #{tpu_custom_call.1} parent=5 // pred_region
        %s1337 = ssub.s32 %s13, 2
        // Predicated region
        $region57: #{tpu_custom_call.1} parent=55 // pred_check
          %p1338 = pneg %p150
        $region58: #{tpu_custom_call.1} parent=55 // pred_check_branch
          %1340 = sbr.rel (%p1338) target = $region60
        $region59: #{tpu_custom_call.1} parent=55 // pred_region
          %s1341 = smul.u32 32, %s24
          %p1342 = scmp.lt.s32.totalorder %s1341, 63
          %s1343 = scalar_select %p1342, %s1341, 63
          %s1344 = smul.addr %s1343, 8
          %s1345 = scalar_lea.vmem %s4, %s1344
        $region60: #{tpu_custom_call.1} parent=55 // pred_fallthru
          _
      $region56: #{tpu_custom_call.1} parent=5 // pred_fallthru
        _
    $region6: #{tpu_custom_call.1} parent=1 // loop_footer
      %s17 = sadd.s32 1, %s13
    $region7: #{tpu_custom_call.1} parent=1 // loop_footer_branch
      %12 = sbr.rel target = $region3
    $region8: #{tpu_custom_call.1} parent=1 // loop_exit
      _
    %1346 = vsyncpa [#allocation4], 1
    %s1347 = scalar_lea.sflag [#allocation4], 1
    %1348 = vsyncpa %s1347, 1

</llo_original>
